<compile_context>
chip_gen: v7x
topology: tpu7x:2x2x1
jax: 0.10.0
libtpu: 0.0.40
codegen_flags: <defaults>
</compile_context>

<pallas_src>
from functools import partial

import jax
import jax.numpy as jnp
from jax.experimental import pallas as pl
from jax.experimental.pallas import tpu as pltpu


# ----------------------------------------------------------------------------
# Pallas kernels
# ----------------------------------------------------------------------------
def _linear_kernel(z_ref, w_ref, b_ref, o_ref):
    # Projector: o = z @ W + b (bf16 operands, f32 accumulation).
    o_ref[...] = (
        jnp.dot(z_ref[...], w_ref[...], preferred_element_type=jnp.float32)
        + b_ref[...]
    )


def _deconv_bn_elu_kernel(p_ref, w_ref, g_ref, b_ref, o_ref):
    # One DeConvBlock, fused: 4 lane-dense phase GEMMs -> BatchNorm2d over all
    # N*OH*OW outputs (training-mode batch stats, biased var, eps=1e-5) -> ELU.
    #   p_ref: (4, K, R) bf16   phase patch matrices (K = 4*C_in, R = B*H*W)
    #   w_ref: (4, C_out, K) bf16
    #   g_ref, b_ref: (C_out, 1) f32
    #   o_ref: (4, C_out, R) bf16
    ys = [
        jnp.dot(w_ref[f], p_ref[f], preferred_element_type=jnp.float32)
        for f in range(4)
    ]
    n = 4.0 * ys[0].shape[1]                      # = N * OH * OW
    mean = sum(jnp.sum(y, axis=1, keepdims=True) for y in ys) / n       # (C,1)
    var = sum(
        jnp.sum(jnp.square(y - mean), axis=1, keepdims=True) for y in ys
    ) / n
    scale = g_ref[...] * jax.lax.rsqrt(var + 1e-5)
    shift = b_ref[...] - mean * scale
    for f in range(4):
        t = ys[f] * scale + shift
        # ELU(alpha=1).  TODO(synk): expm1 would match torch's ELU bit-exactly.
        o_ref[f] = jnp.where(t > 0, t, jnp.exp(t) - 1.0).astype(o_ref.dtype)


def _deconv_tanh_kernel(p_ref, w_ref, o_ref):
    # Final ConvTranspose2d phase GEMM fused with tanh; grid axis = phase.
    #   p_ref: (1, K, R) bf16, w_ref: (1, 3, K) bf16, o_ref: (1, 3, R) f32
    y = jnp.dot(w_ref[0], p_ref[0], preferred_element_type=jnp.float32)
    o_ref[0] = jnp.tanh(y).astype(o_ref.dtype)


# ----------------------------------------------------------------------------
# pallas_call wrappers
# ----------------------------------------------------------------------------
def _zero_idx(i, n):
    return (0,) * n


def _fullblock_call(kernel, args, out_shape):
    """Single-step grid; every operand is one full-array VMEM block."""
    in_specs = [
        pl.BlockSpec(a.shape, partial(_zero_idx, n=a.ndim)) for a in args
    ]
    out_specs = pl.BlockSpec(
        out_shape.shape, partial(_zero_idx, n=len(out_shape.shape))
    )
    return pl.pallas_call(
        kernel,
        grid=(1,),
        in_specs=in_specs,
        out_specs=out_specs,
        out_shape=out_shape,
    )(*args)


def _final_deconv_tanh(patches, wmats):
    """patches: (4, K, R) bf16, wmats: (4, 3, K) bf16 -> (4, 3, R) f32.

    Grid over the 4 output phases, marked "parallel" (v7x: 2 TCs split it)."""
    _, k, r = patches.shape
    co = wmats.shape[1]
    return pl.pallas_call(
        _deconv_tanh_kernel,
        grid=(4,),
        in_specs=[
            pl.BlockSpec((1, k, r), lambda f: (f, 0, 0)),
            pl.BlockSpec((1, co, k), lambda f: (f, 0, 0)),
        ],
        out_specs=pl.BlockSpec((1, co, r), lambda f: (f, 0, 0)),
        out_shape=jax.ShapeDtypeStruct((4, co, r), jnp.float32),
        compiler_params=pltpu.CompilerParams(
            dimension_semantics=("parallel",)
        ),
    )(patches, wmats)


# ----------------------------------------------------------------------------
# Plain-JAX glue: spectral norm, phase-decomposed deconv lowering
# ----------------------------------------------------------------------------
def spectral_normalize(w, key):
    """PyTorch spectral_norm (dim=0, one power iteration, training mode)."""
    c_in = w.shape[0]
    w2d = w.reshape(c_in, -1)
    u = jax.random.normal(key, (c_in,), dtype=w.dtype)
    u = u / (jnp.linalg.norm(u) + 1e-12)
    v = w2d.T @ u
    v = v / (jnp.linalg.norm(v) + 1e-12)
    u = w2d @ v
    u = u / (jnp.linalg.norm(u) + 1e-12)
    sigma = u @ (w2d @ v)
    return w / sigma


def phase_weight_mats(w_t):
    """ConvTranspose2d weight (C_in, C_out, 4, 4) -> per-phase GEMM matrices
    stacked as (4, C_out, 4*C_in).  Phase f = 2*(oh%2) + (ow%2).  K ordering
    is (dh, dw, c_in); tap x[i+ph+dh-1, j+pw+dw-1] pairs with kernel element
    W[:, :, 3-ph-2*dh, 3-pw-2*dw] (derived from oh = 2*ih - pad + kh)."""
    c_in, c_out = w_t.shape[0], w_t.shape[1]
    mats = []
    for ph in range(2):
        for pw_ in range(2):
            taps = [
                w_t[:, :, (3 - ph) - 2 * dh, (3 - pw_) - 2 * dw]
                for dh in range(2)
                for dw in range(2)
            ]
            wm = jnp.stack(taps, axis=0).reshape(4 * c_in, c_out)  # (4C, Cout)
            mats.append(wm.T)                                      # (Cout, 4C)
    return jnp.stack(mats, axis=0)                                 # (4,Cout,4C)


def phase_patches(x):
    """x: (C, B, S, S) channel-major activation -> (4, 4*C, B*S*S) bf16 phase
    patch matrices for ConvTranspose2d(k=4, s=2, p=1).  Only the 2x2 window of
    real taps per phase is gathered (no zero dilation)."""
    c, b, s, _ = x.shape
    xp = jnp.pad(x.astype(jnp.bfloat16), ((0, 0), (0, 0), (1, 1), (1, 1)))
    win = {
        (a0, a1): xp[:, :, a0:a0 + s, a1:a1 + s].reshape(c, b * s * s)
        for a0 in range(3)
        for a1 in range(3)
    }
    phases = []
    for ph in range(2):
        for pw_ in range(2):
            taps = [
                win[(ph + dh, pw_ + dw)] for dh in range(2) for dw in range(2)
            ]
            phases.append(jnp.concatenate(taps, axis=0))           # (4C, R)
    return jnp.stack(phases, axis=0)                               # (4, 4C, R)


def interleave_phases(y, b, s):
    """y: (4, C, B*S*S) phase outputs -> (C, B, 2S, 2S) spatial image with
    out[c, b, 2i+ph, 2j+pw] = y[2*ph+pw, c, (b, i, j)]."""
    c = y.shape[1]
    t = y.reshape(2, 2, c, b, s, s)
    t = jnp.transpose(t, (2, 3, 4, 0, 5, 1))      # (C, B, S, 2, S, 2)
    return t.reshape(c, b, 2 * s, 2 * s)


# ----------------------------------------------------------------------------
# Parameters (deterministic, shapes from GANG.__init__)
# ----------------------------------------------------------------------------
def init_params(key, lat_dim, hidden_dim, depth):
    init_c = hidden_dim * 2 ** (depth - 1)
    keys = jax.random.split(key, 2 * depth + 4)
    proj_out = init_c * 4 * 4
    proj_w = 0.05 * jax.random.normal(keys[0], (lat_dim, proj_out), jnp.float32)
    proj_b = 0.05 * jax.random.normal(keys[1], (proj_out,), jnp.float32)

    blocks = []
    in_c = init_c
    ki = 2
    for i in range(depth - 1):
        out_c = hidden_dim * 2 ** (depth - i - 1)
        w = 0.05 * jax.random.normal(keys[ki], (in_c, out_c, 4, 4), jnp.float32)
        w = spectral_normalize(w, keys[ki + 1])  # use_SN=True
        gamma = jnp.ones((out_c,), jnp.float32)  # BatchNorm2d init
        beta = jnp.zeros((out_c,), jnp.float32)
        blocks.append((w, gamma, beta))
        in_c = out_c
        ki += 2

    final_w = 0.05 * jax.random.normal(keys[ki], (in_c, 3, 4, 4), jnp.float32)
    return {
        "proj_w": proj_w,
        "proj_b": proj_b,
        "blocks": blocks,
        "final_w": final_w,
    }


def prepare_params(params):
    """One-time prep: fold deconv weights into per-phase GEMM mats (bf16)."""
    blocks = []
    for w_sn, gamma, beta in params["blocks"]:
        blocks.append(
            (
                phase_weight_mats(w_sn).astype(jnp.bfloat16),
                gamma.reshape(-1, 1).astype(jnp.float32),
                beta.reshape(-1, 1).astype(jnp.float32),
            )
        )
    return {
        "proj_w": params["proj_w"].astype(jnp.bfloat16),
        "proj_b": params["proj_b"].reshape(1, -1).astype(jnp.float32),
        "blocks": blocks,
        "final_w": phase_weight_mats(params["final_w"]).astype(jnp.bfloat16),
    }


# ----------------------------------------------------------------------------
# GANG forward
# ----------------------------------------------------------------------------
@jax.jit
def gang_forward(z, prepped):
    b = z.shape[0]
    proj_w, proj_b = prepped["proj_w"], prepped["proj_b"]

    # projector (Pallas GEMM)
    lin = _fullblock_call(
        _linear_kernel,
        [z.astype(jnp.bfloat16), proj_w, proj_b],
        jax.ShapeDtypeStruct((b, proj_w.shape[1]), jnp.float32),
    )

    init_c = proj_w.shape[1] // 16
    x = lin.reshape(b, init_c, 4, 4)          # PyTorch view: NCHW
    x = jnp.transpose(x, (1, 0, 2, 3))        # channel-major (C, B, 4, 4)

    # DeConvBlocks: ConvTranspose2d + BatchNorm2d(batch stats) + ELU,
    # each fused into one pallas_call over all 4 output phases.
    # TODO(synk): running-stat (eval-mode) BatchNorm is not modeled.
    for wm, gamma, beta in prepped["blocks"]:
        _, _, s, _ = x.shape
        patches = phase_patches(x)            # (4, 4C, B*S*S) bf16
        co = wm.shape[1]
        r = b * s * s
        y = _fullblock_call(
            _deconv_bn_elu_kernel,
            [patches, wm, gamma, beta],
            jax.ShapeDtypeStruct((4, co, r), jnp.bfloat16),
        )
        x = interleave_phases(y, b, s)        # (Cout, B, 2S, 2S) bf16

    # final ConvTranspose2d(in, 3) + tanh (phase grid, parallel)
    _, _, s, _ = x.shape
    patches = phase_patches(x)                # (4, 4C, B*S*S)
    y = _final_deconv_tanh(patches, prepped["final_w"])  # (4, 3, B*S*S) f32

    # phase outputs -> NCHW image (B, 3, 2S, 2S)
    t = y.reshape(2, 2, 3, b, s, s)
    t = jnp.transpose(t, (3, 2, 4, 0, 5, 1))  # (B, 3, S, 2, S, 2)
    return t.reshape(b, 3, 2 * s, 2 * s)


if __name__ == "__main__":
    key = jax.random.PRNGKey(0)
    lat_dim, hidden_dim, depth, batch = 16, 8, 3, 2

    pkey, zkey = jax.random.split(key)
    params = init_params(pkey, lat_dim, hidden_dim, depth)
    prepped = prepare_params(params)
    z = jax.random.normal(zkey, (batch, lat_dim), jnp.float32)

    out = gang_forward(z, prepped)
    out = jax.block_until_ready(out)

    expected_hw = 4 * 2 ** depth  # 4 -> 8 -> 16 -> 32
    assert out.shape == (batch, 3, expected_hw, expected_hw), out.shape
    assert bool(jnp.all(jnp.isfinite(out)))
    assert bool(jnp.all(jnp.abs(out) <= 1.0))  # tanh range
    print("KERNEL_OK")
</pallas_src>

<mosaic_0001>
module attributes {stable_mosaic.version = 11 : i64} {
  func.func @_linear_kernel(%arg0: i32, %arg1: memref<2x16xbf16, #tpu.memory_space<vmem>>, %arg2: memref<16x512xbf16, #tpu.memory_space<vmem>>, %arg3: memref<1x512xf32, #tpu.memory_space<vmem>>, %arg4: memref<2x512xf32, #tpu.memory_space<vmem>>) attributes {dimension_semantics = [#tpu.dimension_semantics<arbitrary>], iteration_bounds = array<i64: 1>, scalar_prefetch = 0 : i64, scratch_operands = 0 : i64, tpu.core_type = #tpu.core_type<tc>, window_params = [{pipeline_mode = #tpu.pipeline_mode<synchronous>, transform_indices = @transform_0, window_bounds = array<i64: 2, 16>}, {pipeline_mode = #tpu.pipeline_mode<synchronous>, transform_indices = @transform_1, window_bounds = array<i64: 16, 512>}, {pipeline_mode = #tpu.pipeline_mode<synchronous>, transform_indices = @transform_2, window_bounds = array<i64: 1, 512>}, {pipeline_mode = #tpu.pipeline_mode<synchronous>, transform_indices = @transform_3, window_bounds = array<i64: 2, 512>}]} {
    %c0 = arith.constant 0 : index
    %c0_0 = arith.constant 0 : index
    %0 = vector.load %arg1[%c0, %c0_0] : memref<2x16xbf16, #tpu.memory_space<vmem>>, vector<2x16xbf16>
    %c0_1 = arith.constant 0 : index
    %c0_2 = arith.constant 0 : index
    %1 = vector.load %arg2[%c0_1, %c0_2] : memref<16x512xbf16, #tpu.memory_space<vmem>>, vector<16x512xbf16>
    %cst = arith.constant dense<0.000000e+00> : vector<2x512xf32>
    %2 = tpu.matmul %0, %1, %cst {dimension_numbers = #tpu.dot_dimension_numbers<[1], [0], [0], [1], [0, 0, 1, 1], [], []>} : vector<2x16xbf16>, vector<16x512xbf16>, vector<2x512xf32> -> vector<2x512xf32>
    %c0_3 = arith.constant 0 : index
    %c0_4 = arith.constant 0 : index
    %3 = vector.load %arg3[%c0_3, %c0_4] : memref<1x512xf32, #tpu.memory_space<vmem>>, vector<1x512xf32>
    %4 = vector.broadcast %3 : vector<1x512xf32> to vector<2x512xf32>
    %5 = arith.addf %2, %4 : vector<2x512xf32>
    %c0_5 = arith.constant 0 : index
    %c0_6 = arith.constant 0 : index
    %6 = vector.load %arg4[%c0_5, %c0_6] : memref<2x512xf32, #tpu.memory_space<vmem>>, vector<2x512xf32>
    tpu.vector_store %arg4[%c0_5, %c0_6], %5 {strides = array<i32>} : memref<2x512xf32, #tpu.memory_space<vmem>>, vector<2x512xf32>,
    return
  }
  func.func @transform_0(%arg0: i32) -> (i32, i32) {
    %c0_i32 = arith.constant 0 : i32
    %c0_i32_0 = arith.constant 0 : i32
    %c0_i32_1 = arith.constant 0 : i32
    return %c0_i32, %c0_i32_0 : i32, i32
  }
  func.func @transform_1(%arg0: i32) -> (i32, i32) {
    %c0_i32 = arith.constant 0 : i32
    %c0_i32_0 = arith.constant 0 : i32
    %c0_i32_1 = arith.constant 0 : i32
    return %c0_i32, %c0_i32_0 : i32, i32
  }
  func.func @transform_2(%arg0: i32) -> (i32, i32) {
    %c0_i32 = arith.constant 0 : i32
    %c0_i32_0 = arith.constant 0 : i32
    %c0_i32_1 = arith.constant 0 : i32
    return %c0_i32, %c0_i32_0 : i32, i32
  }
  func.func @transform_3(%arg0: i32) -> (i32, i32) {
    %c0_i32 = arith.constant 0 : i32
    %c0_i32_0 = arith.constant 0 : i32
    %c0_i32_1 = arith.constant 0 : i32
    return %c0_i32, %c0_i32_0 : i32, i32
  }
}

module attributes {stable_mosaic.version = 11 : i64} {
  func.func @_deconv_bn_elu_kernel(%arg0: i32, %arg1: memref<4x128x32xbf16, #tpu.memory_space<vmem>>, %arg2: memref<4x32x128xbf16, #tpu.memory_space<vmem>>, %arg3: memref<32x1xf32, #tpu.memory_space<vmem>>, %arg4: memref<32x1xf32, #tpu.memory_space<vmem>>, %arg5: memref<4x32x32xbf16, #tpu.memory_space<vmem>>) attributes {dimension_semantics = [#tpu.dimension_semantics<arbitrary>], iteration_bounds = array<i64: 1>, scalar_prefetch = 0 : i64, scratch_operands = 0 : i64, tpu.core_type = #tpu.core_type<tc>, window_params = [{pipeline_mode = #tpu.pipeline_mode<synchronous>, transform_indices = @transform_0, window_bounds = array<i64: 4, 128, 32>}, {pipeline_mode = #tpu.pipeline_mode<synchronous>, transform_indices = @transform_1, window_bounds = array<i64: 4, 32, 128>}, {pipeline_mode = #tpu.pipeline_mode<synchronous>, transform_indices = @transform_2, window_bounds = array<i64: 32, 1>}, {pipeline_mode = #tpu.pipeline_mode<synchronous>, transform_indices = @transform_3, window_bounds = array<i64: 32, 1>}, {pipeline_mode = #tpu.pipeline_mode<synchronous>, transform_indices = @transform_4, window_bounds = array<i64: 4, 32, 32>}]} {
    %c0 = arith.constant 0 : index
    %c0_0 = arith.constant 0 : index
    %c0_1 = arith.constant 0 : index
    %0 = vector.load %arg2[%c0, %c0_0, %c0_1] : memref<4x32x128xbf16, #tpu.memory_space<vmem>>, vector<1x32x128xbf16>
    %1 = vector.shape_cast %0 : vector<1x32x128xbf16> to vector<32x128xbf16>
    %c0_2 = arith.constant 0 : index
    %c0_3 = arith.constant 0 : index
    %c0_4 = arith.constant 0 : index
    %2 = vector.load %arg1[%c0_2, %c0_3, %c0_4] : memref<4x128x32xbf16, #tpu.memory_space<vmem>>, vector<1x128x32xbf16>
    %3 = vector.shape_cast %2 : vector<1x128x32xbf16> to vector<128x32xbf16>
    %cst = arith.constant dense<0.000000e+00> : vector<32x32xf32>
    %4 = tpu.matmul %1, %3, %cst {dimension_numbers = #tpu.dot_dimension_numbers<[1], [0], [0], [1], [0, 0, 1, 1], [], []>} : vector<32x128xbf16>, vector<128x32xbf16>, vector<32x32xf32> -> vector<32x32xf32>
    %c1 = arith.constant 1 : index
    %c0_5 = arith.constant 0 : index
    %c0_6 = arith.constant 0 : index
    %5 = vector.load %arg2[%c1, %c0_5, %c0_6] : memref<4x32x128xbf16, #tpu.memory_space<vmem>>, vector<1x32x128xbf16>
    %6 = vector.shape_cast %5 : vector<1x32x128xbf16> to vector<32x128xbf16>
    %c1_7 = arith.constant 1 : index
    %c0_8 = arith.constant 0 : index
    %c0_9 = arith.constant 0 : index
    %7 = vector.load %arg1[%c1_7, %c0_8, %c0_9] : memref<4x128x32xbf16, #tpu.memory_space<vmem>>, vector<1x128x32xbf16>
    %8 = vector.shape_cast %7 : vector<1x128x32xbf16> to vector<128x32xbf16>
    %cst_10 = arith.constant dense<0.000000e+00> : vector<32x32xf32>
    %9 = tpu.matmul %6, %8, %cst_10 {dimension_numbers = #tpu.dot_dimension_numbers<[1], [0], [0], [1], [0, 0, 1, 1], [], []>} : vector<32x128xbf16>, vector<128x32xbf16>, vector<32x32xf32> -> vector<32x32xf32>
    %c2 = arith.constant 2 : index
    %c0_11 = arith.constant 0 : index
    %c0_12 = arith.constant 0 : index
    %10 = vector.load %arg2[%c2, %c0_11, %c0_12] : memref<4x32x128xbf16, #tpu.memory_space<vmem>>, vector<1x32x128xbf16>
    %11 = vector.shape_cast %10 : vector<1x32x128xbf16> to vector<32x128xbf16>
    %c2_13 = arith.constant 2 : index
    %c0_14 = arith.constant 0 : index
    %c0_15 = arith.constant 0 : index
    %12 = vector.load %arg1[%c2_13, %c0_14, %c0_15] : memref<4x128x32xbf16, #tpu.memory_space<vmem>>, vector<1x128x32xbf16>
    %13 = vector.shape_cast %12 : vector<1x128x32xbf16> to vector<128x32xbf16>
    %cst_16 = arith.constant dense<0.000000e+00> : vector<32x32xf32>
    %14 = tpu.matmul %11, %13, %cst_16 {dimension_numbers = #tpu.dot_dimension_numbers<[1], [0], [0], [1], [0, 0, 1, 1], [], []>} : vector<32x128xbf16>, vector<128x32xbf16>, vector<32x32xf32> -> vector<32x32xf32>
    %c3 = arith.constant 3 : index
    %c0_17 = arith.constant 0 : index
    %c0_18 = arith.constant 0 : index
    %15 = vector.load %arg2[%c3, %c0_17, %c0_18] : memref<4x32x128xbf16, #tpu.memory_space<vmem>>, vector<1x32x128xbf16>
    %16 = vector.shape_cast %15 : vector<1x32x128xbf16> to vector<32x128xbf16>
    %c3_19 = arith.constant 3 : index
    %c0_20 = arith.constant 0 : index
    %c0_21 = arith.constant 0 : index
    %17 = vector.load %arg1[%c3_19, %c0_20, %c0_21] : memref<4x128x32xbf16, #tpu.memory_space<vmem>>, vector<1x128x32xbf16>
    %18 = vector.shape_cast %17 : vector<1x128x32xbf16> to vector<128x32xbf16>
    %cst_22 = arith.constant dense<0.000000e+00> : vector<32x32xf32>
    %19 = tpu.matmul %16, %18, %cst_22 {dimension_numbers = #tpu.dot_dimension_numbers<[1], [0], [0], [1], [0, 0, 1, 1], [], []>} : vector<32x128xbf16>, vector<128x32xbf16>, vector<32x32xf32> -> vector<32x32xf32>
    %cst_23 = arith.constant dense<0.000000e+00> : vector<32xf32>
    %20 = vector.multi_reduction <add>, %4, %cst_23 [1] : vector<32x32xf32> to vector<32xf32>
    %21 = vector.shape_cast %20 : vector<32xf32> to vector<32x1xf32>
    %cst_24 = arith.constant 0.000000e+00 : f32
    %22 = vector.broadcast %cst_24 : f32 to vector<32x1xf32>
    %23 = arith.addf %22, %21 : vector<32x1xf32>
    %cst_25 = arith.constant dense<0.000000e+00> : vector<32xf32>
    %24 = vector.multi_reduction <add>, %9, %cst_25 [1] : vector<32x32xf32> to vector<32xf32>
    %25 = vector.shape_cast %24 : vector<32xf32> to vector<32x1xf32>
    %26 = arith.addf %23, %25 : vector<32x1xf32>
    %cst_26 = arith.constant dense<0.000000e+00> : vector<32xf32>
    %27 = vector.multi_reduction <add>, %14, %cst_26 [1] : vector<32x32xf32> to vector<32xf32>
    %28 = vector.shape_cast %27 : vector<32xf32> to vector<32x1xf32>
    %29 = arith.addf %26, %28 : vector<32x1xf32>
    %cst_27 = arith.constant dense<0.000000e+00> : vector<32xf32>
    %30 = vector.multi_reduction <add>, %19, %cst_27 [1] : vector<32x32xf32> to vector<32xf32>
    %31 = vector.shape_cast %30 : vector<32xf32> to vector<32x1xf32>
    %32 = arith.addf %29, %31 : vector<32x1xf32>
    %cst_28 = arith.constant 1.280000e+02 : f32
    %33 = vector.broadcast %cst_28 : f32 to vector<32x1xf32>
    %34 = arith.divf %32, %33 : vector<32x1xf32>
    %35 = vector.broadcast %34 : vector<32x1xf32> to vector<32x32xf32>
    %36 = arith.subf %4, %35 : vector<32x32xf32>
    %37 = arith.mulf %36, %36 : vector<32x32xf32>
    %cst_29 = arith.constant dense<0.000000e+00> : vector<32xf32>
    %38 = vector.multi_reduction <add>, %37, %cst_29 [1] : vector<32x32xf32> to vector<32xf32>
    %39 = vector.shape_cast %38 : vector<32xf32> to vector<32x1xf32>
    %cst_30 = arith.constant 0.000000e+00 : f32
    %40 = vector.broadcast %cst_30 : f32 to vector<32x1xf32>
    %41 = arith.addf %40, %39 : vector<32x1xf32>
    %42 = vector.broadcast %34 : vector<32x1xf32> to vector<32x32xf32>
    %43 = arith.subf %9, %42 : vector<32x32xf32>
    %44 = arith.mulf %43, %43 : vector<32x32xf32>
    %cst_31 = arith.constant dense<0.000000e+00> : vector<32xf32>
    %45 = vector.multi_reduction <add>, %44, %cst_31 [1] : vector<32x32xf32> to vector<32xf32>
    %46 = vector.shape_cast %45 : vector<32xf32> to vector<32x1xf32>
    %47 = arith.addf %41, %46 : vector<32x1xf32>
    %48 = vector.broadcast %34 : vector<32x1xf32> to vector<32x32xf32>
    %49 = arith.subf %14, %48 : vector<32x32xf32>
    %50 = arith.mulf %49, %49 : vector<32x32xf32>
    %cst_32 = arith.constant dense<0.000000e+00> : vector<32xf32>
    %51 = vector.multi_reduction <add>, %50, %cst_32 [1] : vector<32x32xf32> to vector<32xf32>
    %52 = vector.shape_cast %51 : vector<32xf32> to vector<32x1xf32>
    %53 = arith.addf %47, %52 : vector<32x1xf32>
    %54 = vector.broadcast %34 : vector<32x1xf32> to vector<32x32xf32>
    %55 = arith.subf %19, %54 : vector<32x32xf32>
    %56 = arith.mulf %55, %55 : vector<32x32xf32>
    %cst_33 = arith.constant dense<0.000000e+00> : vector<32xf32>
    %57 = vector.multi_reduction <add>, %56, %cst_33 [1] : vector<32x32xf32> to vector<32xf32>
    %58 = vector.shape_cast %57 : vector<32xf32> to vector<32x1xf32>
    %59 = arith.addf %53, %58 : vector<32x1xf32>
    %cst_34 = arith.constant 1.280000e+02 : f32
    %60 = vector.broadcast %cst_34 : f32 to vector<32x1xf32>
    %61 = arith.divf %59, %60 : vector<32x1xf32>
    %c0_35 = arith.constant 0 : index
    %c0_36 = arith.constant 0 : index
    %62 = vector.load %arg3[%c0_35, %c0_36] : memref<32x1xf32, #tpu.memory_space<vmem>>, vector<32x1xf32>
    %cst_37 = arith.constant 9.99999974E-6 : f32
    %63 = vector.broadcast %cst_37 : f32 to vector<32x1xf32>
    %64 = arith.addf %61, %63 : vector<32x1xf32>
    %65 = math.rsqrt %64 : vector<32x1xf32>
    %66 = arith.mulf %62, %65 : vector<32x1xf32>
    %c0_38 = arith.constant 0 : index
    %c0_39 = arith.constant 0 : index
    %67 = vector.load %arg4[%c0_38, %c0_39] : memref<32x1xf32, #tpu.memory_space<vmem>>, vector<32x1xf32>
    %68 = arith.mulf %34, %66 : vector<32x1xf32>
    %69 = arith.subf %67, %68 : vector<32x1xf32>
    %70 = vector.broadcast %66 : vector<32x1xf32> to vector<32x32xf32>
    %71 = arith.mulf %4, %70 : vector<32x32xf32>
    %72 = vector.broadcast %69 : vector<32x1xf32> to vector<32x32xf32>
    %73 = arith.addf %71, %72 : vector<32x32xf32>
    %cst_40 = arith.constant 0.000000e+00 : f32
    %74 = vector.broadcast %cst_40 : f32 to vector<32x32xf32>
    %75 = arith.cmpf ogt, %73, %74 : vector<32x32xf32>
    %76 = math.exp %73 : vector<32x32xf32>
    %cst_41 = arith.constant 1.000000e+00 : f32
    %77 = vector.broadcast %cst_41 : f32 to vector<32x32xf32>
    %78 = arith.subf %76, %77 : vector<32x32xf32>
    %79 = arith.select %75, %73, %78 : vector<32x32xi1>, vector<32x32xf32>
    %80 = arith.truncf %79 : vector<32x32xf32> to vector<32x32xbf16>
    %c0_42 = arith.constant 0 : index
    %c0_43 = arith.constant 0 : index
    %c0_44 = arith.constant 0 : index
    %81 = vector.load %arg5[%c0_42, %c0_43, %c0_44] : memref<4x32x32xbf16, #tpu.memory_space<vmem>>, vector<1x32x32xbf16>
    %82 = vector.shape_cast %81 : vector<1x32x32xbf16> to vector<32x32xbf16>
    %83 = vector.shape_cast %80 : vector<32x32xbf16> to vector<1x32x32xbf16>
    tpu.vector_store %arg5[%c0_42, %c0_43, %c0_44], %83 {strides = array<i32>} : memref<4x32x32xbf16, #tpu.memory_space<vmem>>, vector<1x32x32xbf16>,
    %84 = vector.broadcast %66 : vector<32x1xf32> to vector<32x32xf32>
    %85 = arith.mulf %9, %84 : vector<32x32xf32>
    %86 = vector.broadcast %69 : vector<32x1xf32> to vector<32x32xf32>
    %87 = arith.addf %85, %86 : vector<32x32xf32>
    %cst_45 = arith.constant 0.000000e+00 : f32
    %88 = vector.broadcast %cst_45 : f32 to vector<32x32xf32>
    %89 = arith.cmpf ogt, %87, %88 : vector<32x32xf32>
    %90 = math.exp %87 : vector<32x32xf32>
    %cst_46 = arith.constant 1.000000e+00 : f32
    %91 = vector.broadcast %cst_46 : f32 to vector<32x32xf32>
    %92 = arith.subf %90, %91 : vector<32x32xf32>
    %93 = arith.select %89, %87, %92 : vector<32x32xi1>, vector<32x32xf32>
    %94 = arith.truncf %93 : vector<32x32xf32> to vector<32x32xbf16>
    %c1_47 = arith.constant 1 : index
    %c0_48 = arith.constant 0 : index
    %c0_49 = arith.constant 0 : index
    %95 = vector.load %arg5[%c1_47, %c0_48, %c0_49] : memref<4x32x32xbf16, #tpu.memory_space<vmem>>, vector<1x32x32xbf16>
    %96 = vector.shape_cast %95 : vector<1x32x32xbf16> to vector<32x32xbf16>
    %97 = vector.shape_cast %94 : vector<32x32xbf16> to vector<1x32x32xbf16>
    tpu.vector_store %arg5[%c1_47, %c0_48, %c0_49], %97 {strides = array<i32>} : memref<4x32x32xbf16, #tpu.memory_space<vmem>>, vector<1x32x32xbf16>,
    %98 = vector.broadcast %66 : vector<32x1xf32> to vector<32x32xf32>
    %99 = arith.mulf %14, %98 : vector<32x32xf32>
    %100 = vector.broadcast %69 : vector<32x1xf32> to vector<32x32xf32>
    %101 = arith.addf %99, %100 : vector<32x32xf32>
    %cst_50 = arith.constant 0.000000e+00 : f32
    %102 = vector.broadcast %cst_50 : f32 to vector<32x32xf32>
    %103 = arith.cmpf ogt, %101, %102 : vector<32x32xf32>
    %104 = math.exp %101 : vector<32x32xf32>
    %cst_51 = arith.constant 1.000000e+00 : f32
    %105 = vector.broadcast %cst_51 : f32 to vector<32x32xf32>
    %106 = arith.subf %104, %105 : vector<32x32xf32>
    %107 = arith.select %103, %101, %106 : vector<32x32xi1>, vector<32x32xf32>
    %108 = arith.truncf %107 : vector<32x32xf32> to vector<32x32xbf16>
    %c2_52 = arith.constant 2 : index
    %c0_53 = arith.constant 0 : index
    %c0_54 = arith.constant 0 : index
    %109 = vector.load %arg5[%c2_52, %c0_53, %c0_54] : memref<4x32x32xbf16, #tpu.memory_space<vmem>>, vector<1x32x32xbf16>
    %110 = vector.shape_cast %109 : vector<1x32x32xbf16> to vector<32x32xbf16>
    %111 = vector.shape_cast %108 : vector<32x32xbf16> to vector<1x32x32xbf16>
    tpu.vector_store %arg5[%c2_52, %c0_53, %c0_54], %111 {strides = array<i32>} : memref<4x32x32xbf16, #tpu.memory_space<vmem>>, vector<1x32x32xbf16>,
    %112 = vector.broadcast %66 : vector<32x1xf32> to vector<32x32xf32>
    %113 = arith.mulf %19, %112 : vector<32x32xf32>
    %114 = vector.broadcast %69 : vector<32x1xf32> to vector<32x32xf32>
    %115 = arith.addf %113, %114 : vector<32x32xf32>
    %cst_55 = arith.constant 0.000000e+00 : f32
    %116 = vector.broadcast %cst_55 : f32 to vector<32x32xf32>
    %117 = arith.cmpf ogt, %115, %116 : vector<32x32xf32>
    %118 = math.exp %115 : vector<32x32xf32>
    %cst_56 = arith.constant 1.000000e+00 : f32
    %119 = vector.broadcast %cst_56 : f32 to vector<32x32xf32>
    %120 = arith.subf %118, %119 : vector<32x32xf32>
    %121 = arith.select %117, %115, %120 : vector<32x32xi1>, vector<32x32xf32>
    %122 = arith.truncf %121 : vector<32x32xf32> to vector<32x32xbf16>
    %c3_57 = arith.constant 3 : index
    %c0_58 = arith.constant 0 : index
    %c0_59 = arith.constant 0 : index
    %123 = vector.load %arg5[%c3_57, %c0_58, %c0_59] : memref<4x32x32xbf16, #tpu.memory_space<vmem>>, vector<1x32x32xbf16>
    %124 = vector.shape_cast %123 : vector<1x32x32xbf16> to vector<32x32xbf16>
    %125 = vector.shape_cast %122 : vector<32x32xbf16> to vector<1x32x32xbf16>
    tpu.vector_store %arg5[%c3_57, %c0_58, %c0_59], %125 {strides = array<i32>} : memref<4x32x32xbf16, #tpu.memory_space<vmem>>, vector<1x32x32xbf16>,
    return
  }
  func.func @transform_0(%arg0: i32) -> (i32, i32, i32) {
    %c0_i32 = arith.constant 0 : i32
    %c0_i32_0 = arith.constant 0 : i32
    %c0_i32_1 = arith.constant 0 : i32
    %c0_i32_2 = arith.constant 0 : i32
    return %c0_i32, %c0_i32_0, %c0_i32_1 : i32, i32, i32
  }
  func.func @transform_1(%arg0: i32) -> (i32, i32, i32) {
    %c0_i32 = arith.constant 0 : i32
    %c0_i32_0 = arith.constant 0 : i32
    %c0_i32_1 = arith.constant 0 : i32
    %c0_i32_2 = arith.constant 0 : i32
    return %c0_i32, %c0_i32_0, %c0_i32_1 : i32, i32, i32
  }
  func.func @transform_2(%arg0: i32) -> (i32, i32) {
    %c0_i32 = arith.constant 0 : i32
    %c0_i32_0 = arith.constant 0 : i32
    %c0_i32_1 = arith.constant 0 : i32
    return %c0_i32, %c0_i32_0 : i32, i32
  }
  func.func @transform_3(%arg0: i32) -> (i32, i32) {
    %c0_i32 = arith.constant 0 : i32
    %c0_i32_0 = arith.constant 0 : i32
    %c0_i32_1 = arith.constant 0 : i32
    return %c0_i32, %c0_i32_0 : i32, i32
  }
  func.func @transform_4(%arg0: i32) -> (i32, i32, i32) {
    %c0_i32 = arith.constant 0 : i32
    %c0_i32_0 = arith.constant 0 : i32
    %c0_i32_1 = arith.constant 0 : i32
    %c0_i32_2 = arith.constant 0 : i32
    return %c0_i32, %c0_i32_0, %c0_i32_1 : i32, i32, i32
  }
}

module attributes {stable_mosaic.version = 11 : i64} {
  func.func @_deconv_bn_elu_kernel(%arg0: i32, %arg1: memref<4x128x128xbf16, #tpu.memory_space<vmem>>, %arg2: memref<4x16x128xbf16, #tpu.memory_space<vmem>>, %arg3: memref<16x1xf32, #tpu.memory_space<vmem>>, %arg4: memref<16x1xf32, #tpu.memory_space<vmem>>, %arg5: memref<4x16x128xbf16, #tpu.memory_space<vmem>>) attributes {dimension_semantics = [#tpu.dimension_semantics<arbitrary>], iteration_bounds = array<i64: 1>, scalar_prefetch = 0 : i64, scratch_operands = 0 : i64, tpu.core_type = #tpu.core_type<tc>, window_params = [{pipeline_mode = #tpu.pipeline_mode<synchronous>, transform_indices = @transform_0, window_bounds = array<i64: 4, 128, 128>}, {pipeline_mode = #tpu.pipeline_mode<synchronous>, transform_indices = @transform_1, window_bounds = array<i64: 4, 16, 128>}, {pipeline_mode = #tpu.pipeline_mode<synchronous>, transform_indices = @transform_2, window_bounds = array<i64: 16, 1>}, {pipeline_mode = #tpu.pipeline_mode<synchronous>, transform_indices = @transform_3, window_bounds = array<i64: 16, 1>}, {pipeline_mode = #tpu.pipeline_mode<synchronous>, transform_indices = @transform_4, window_bounds = array<i64: 4, 16, 128>}]} {
    %c0 = arith.constant 0 : index
    %c0_0 = arith.constant 0 : index
    %c0_1 = arith.constant 0 : index
    %0 = vector.load %arg2[%c0, %c0_0, %c0_1] : memref<4x16x128xbf16, #tpu.memory_space<vmem>>, vector<1x16x128xbf16>
    %1 = vector.shape_cast %0 : vector<1x16x128xbf16> to vector<16x128xbf16>
    %c0_2 = arith.constant 0 : index
    %c0_3 = arith.constant 0 : index
    %c0_4 = arith.constant 0 : index
    %2 = vector.load %arg1[%c0_2, %c0_3, %c0_4] : memref<4x128x128xbf16, #tpu.memory_space<vmem>>, vector<1x128x128xbf16>
    %3 = vector.shape_cast %2 : vector<1x128x128xbf16> to vector<128x128xbf16>
    %cst = arith.constant dense<0.000000e+00> : vector<16x128xf32>
    %4 = tpu.matmul %1, %3, %cst {dimension_numbers = #tpu.dot_dimension_numbers<[1], [0], [0], [1], [0, 0, 1, 1], [], []>} : vector<16x128xbf16>, vector<128x128xbf16>, vector<16x128xf32> -> vector<16x128xf32>
    %c1 = arith.constant 1 : index
    %c0_5 = arith.constant 0 : index
    %c0_6 = arith.constant 0 : index
    %5 = vector.load %arg2[%c1, %c0_5, %c0_6] : memref<4x16x128xbf16, #tpu.memory_space<vmem>>, vector<1x16x128xbf16>
    %6 = vector.shape_cast %5 : vector<1x16x128xbf16> to vector<16x128xbf16>
    %c1_7 = arith.constant 1 : index
    %c0_8 = arith.constant 0 : index
    %c0_9 = arith.constant 0 : index
    %7 = vector.load %arg1[%c1_7, %c0_8, %c0_9] : memref<4x128x128xbf16, #tpu.memory_space<vmem>>, vector<1x128x128xbf16>
    %8 = vector.shape_cast %7 : vector<1x128x128xbf16> to vector<128x128xbf16>
    %cst_10 = arith.constant dense<0.000000e+00> : vector<16x128xf32>
    %9 = tpu.matmul %6, %8, %cst_10 {dimension_numbers = #tpu.dot_dimension_numbers<[1], [0], [0], [1], [0, 0, 1, 1], [], []>} : vector<16x128xbf16>, vector<128x128xbf16>, vector<16x128xf32> -> vector<16x128xf32>
    %c2 = arith.constant 2 : index
    %c0_11 = arith.constant 0 : index
    %c0_12 = arith.constant 0 : index
    %10 = vector.load %arg2[%c2, %c0_11, %c0_12] : memref<4x16x128xbf16, #tpu.memory_space<vmem>>, vector<1x16x128xbf16>
    %11 = vector.shape_cast %10 : vector<1x16x128xbf16> to vector<16x128xbf16>
    %c2_13 = arith.constant 2 : index
    %c0_14 = arith.constant 0 : index
    %c0_15 = arith.constant 0 : index
    %12 = vector.load %arg1[%c2_13, %c0_14, %c0_15] : memref<4x128x128xbf16, #tpu.memory_space<vmem>>, vector<1x128x128xbf16>
    %13 = vector.shape_cast %12 : vector<1x128x128xbf16> to vector<128x128xbf16>
    %cst_16 = arith.constant dense<0.000000e+00> : vector<16x128xf32>
    %14 = tpu.matmul %11, %13, %cst_16 {dimension_numbers = #tpu.dot_dimension_numbers<[1], [0], [0], [1], [0, 0, 1, 1], [], []>} : vector<16x128xbf16>, vector<128x128xbf16>, vector<16x128xf32> -> vector<16x128xf32>
    %c3 = arith.constant 3 : index
    %c0_17 = arith.constant 0 : index
    %c0_18 = arith.constant 0 : index
    %15 = vector.load %arg2[%c3, %c0_17, %c0_18] : memref<4x16x128xbf16, #tpu.memory_space<vmem>>, vector<1x16x128xbf16>
    %16 = vector.shape_cast %15 : vector<1x16x128xbf16> to vector<16x128xbf16>
    %c3_19 = arith.constant 3 : index
    %c0_20 = arith.constant 0 : index
    %c0_21 = arith.constant 0 : index
    %17 = vector.load %arg1[%c3_19, %c0_20, %c0_21] : memref<4x128x128xbf16, #tpu.memory_space<vmem>>, vector<1x128x128xbf16>
    %18 = vector.shape_cast %17 : vector<1x128x128xbf16> to vector<128x128xbf16>
    %cst_22 = arith.constant dense<0.000000e+00> : vector<16x128xf32>
    %19 = tpu.matmul %16, %18, %cst_22 {dimension_numbers = #tpu.dot_dimension_numbers<[1], [0], [0], [1], [0, 0, 1, 1], [], []>} : vector<16x128xbf16>, vector<128x128xbf16>, vector<16x128xf32> -> vector<16x128xf32>
    %cst_23 = arith.constant dense<0.000000e+00> : vector<16xf32>
    %20 = vector.multi_reduction <add>, %4, %cst_23 [1] : vector<16x128xf32> to vector<16xf32>
    %21 = vector.shape_cast %20 : vector<16xf32> to vector<16x1xf32>
    %cst_24 = arith.constant 0.000000e+00 : f32
    %22 = vector.broadcast %cst_24 : f32 to vector<16x1xf32>
    %23 = arith.addf %22, %21 : vector<16x1xf32>
    %cst_25 = arith.constant dense<0.000000e+00> : vector<16xf32>
    %24 = vector.multi_reduction <add>, %9, %cst_25 [1] : vector<16x128xf32> to vector<16xf32>
    %25 = vector.shape_cast %24 : vector<16xf32> to vector<16x1xf32>
    %26 = arith.addf %23, %25 : vector<16x1xf32>
    %cst_26 = arith.constant dense<0.000000e+00> : vector<16xf32>
    %27 = vector.multi_reduction <add>, %14, %cst_26 [1] : vector<16x128xf32> to vector<16xf32>
    %28 = vector.shape_cast %27 : vector<16xf32> to vector<16x1xf32>
    %29 = arith.addf %26, %28 : vector<16x1xf32>
    %cst_27 = arith.constant dense<0.000000e+00> : vector<16xf32>
    %30 = vector.multi_reduction <add>, %19, %cst_27 [1] : vector<16x128xf32> to vector<16xf32>
    %31 = vector.shape_cast %30 : vector<16xf32> to vector<16x1xf32>
    %32 = arith.addf %29, %31 : vector<16x1xf32>
    %cst_28 = arith.constant 5.120000e+02 : f32
    %33 = vector.broadcast %cst_28 : f32 to vector<16x1xf32>
    %34 = arith.divf %32, %33 : vector<16x1xf32>
    %35 = vector.broadcast %34 : vector<16x1xf32> to vector<16x128xf32>
    %36 = arith.subf %4, %35 : vector<16x128xf32>
    %37 = arith.mulf %36, %36 : vector<16x128xf32>
    %cst_29 = arith.constant dense<0.000000e+00> : vector<16xf32>
    %38 = vector.multi_reduction <add>, %37, %cst_29 [1] : vector<16x128xf32> to vector<16xf32>
    %39 = vector.shape_cast %38 : vector<16xf32> to vector<16x1xf32>
    %cst_30 = arith.constant 0.000000e+00 : f32
    %40 = vector.broadcast %cst_30 : f32 to vector<16x1xf32>
    %41 = arith.addf %40, %39 : vector<16x1xf32>
    %42 = vector.broadcast %34 : vector<16x1xf32> to vector<16x128xf32>
    %43 = arith.subf %9, %42 : vector<16x128xf32>
    %44 = arith.mulf %43, %43 : vector<16x128xf32>
    %cst_31 = arith.constant dense<0.000000e+00> : vector<16xf32>
    %45 = vector.multi_reduction <add>, %44, %cst_31 [1] : vector<16x128xf32> to vector<16xf32>
    %46 = vector.shape_cast %45 : vector<16xf32> to vector<16x1xf32>
    %47 = arith.addf %41, %46 : vector<16x1xf32>
    %48 = vector.broadcast %34 : vector<16x1xf32> to vector<16x128xf32>
    %49 = arith.subf %14, %48 : vector<16x128xf32>
    %50 = arith.mulf %49, %49 : vector<16x128xf32>
    %cst_32 = arith.constant dense<0.000000e+00> : vector<16xf32>
    %51 = vector.multi_reduction <add>, %50, %cst_32 [1] : vector<16x128xf32> to vector<16xf32>
    %52 = vector.shape_cast %51 : vector<16xf32> to vector<16x1xf32>
    %53 = arith.addf %47, %52 : vector<16x1xf32>
    %54 = vector.broadcast %34 : vector<16x1xf32> to vector<16x128xf32>
    %55 = arith.subf %19, %54 : vector<16x128xf32>
    %56 = arith.mulf %55, %55 : vector<16x128xf32>
    %cst_33 = arith.constant dense<0.000000e+00> : vector<16xf32>
    %57 = vector.multi_reduction <add>, %56, %cst_33 [1] : vector<16x128xf32> to vector<16xf32>
    %58 = vector.shape_cast %57 : vector<16xf32> to vector<16x1xf32>
    %59 = arith.addf %53, %58 : vector<16x1xf32>
    %cst_34 = arith.constant 5.120000e+02 : f32
    %60 = vector.broadcast %cst_34 : f32 to vector<16x1xf32>
    %61 = arith.divf %59, %60 : vector<16x1xf32>
    %c0_35 = arith.constant 0 : index
    %c0_36 = arith.constant 0 : index
    %62 = vector.load %arg3[%c0_35, %c0_36] : memref<16x1xf32, #tpu.memory_space<vmem>>, vector<16x1xf32>
    %cst_37 = arith.constant 9.99999974E-6 : f32
    %63 = vector.broadcast %cst_37 : f32 to vector<16x1xf32>
    %64 = arith.addf %61, %63 : vector<16x1xf32>
    %65 = math.rsqrt %64 : vector<16x1xf32>
    %66 = arith.mulf %62, %65 : vector<16x1xf32>
    %c0_38 = arith.constant 0 : index
    %c0_39 = arith.constant 0 : index
    %67 = vector.load %arg4[%c0_38, %c0_39] : memref<16x1xf32, #tpu.memory_space<vmem>>, vector<16x1xf32>
    %68 = arith.mulf %34, %66 : vector<16x1xf32>
    %69 = arith.subf %67, %68 : vector<16x1xf32>
    %70 = vector.broadcast %66 : vector<16x1xf32> to vector<16x128xf32>
    %71 = arith.mulf %4, %70 : vector<16x128xf32>
    %72 = vector.broadcast %69 : vector<16x1xf32> to vector<16x128xf32>
    %73 = arith.addf %71, %72 : vector<16x128xf32>
    %cst_40 = arith.constant 0.000000e+00 : f32
    %74 = vector.broadcast %cst_40 : f32 to vector<16x128xf32>
    %75 = arith.cmpf ogt, %73, %74 : vector<16x128xf32>
    %76 = math.exp %73 : vector<16x128xf32>
    %cst_41 = arith.constant 1.000000e+00 : f32
    %77 = vector.broadcast %cst_41 : f32 to vector<16x128xf32>
    %78 = arith.subf %76, %77 : vector<16x128xf32>
    %79 = arith.select %75, %73, %78 : vector<16x128xi1>, vector<16x128xf32>
    %80 = arith.truncf %79 : vector<16x128xf32> to vector<16x128xbf16>
    %c0_42 = arith.constant 0 : index
    %c0_43 = arith.constant 0 : index
    %c0_44 = arith.constant 0 : index
    %81 = vector.load %arg5[%c0_42, %c0_43, %c0_44] : memref<4x16x128xbf16, #tpu.memory_space<vmem>>, vector<1x16x128xbf16>
    %82 = vector.shape_cast %81 : vector<1x16x128xbf16> to vector<16x128xbf16>
    %83 = vector.shape_cast %80 : vector<16x128xbf16> to vector<1x16x128xbf16>
    tpu.vector_store %arg5[%c0_42, %c0_43, %c0_44], %83 {strides = array<i32>} : memref<4x16x128xbf16, #tpu.memory_space<vmem>>, vector<1x16x128xbf16>,
    %84 = vector.broadcast %66 : vector<16x1xf32> to vector<16x128xf32>
    %85 = arith.mulf %9, %84 : vector<16x128xf32>
    %86 = vector.broadcast %69 : vector<16x1xf32> to vector<16x128xf32>
    %87 = arith.addf %85, %86 : vector<16x128xf32>
    %cst_45 = arith.constant 0.000000e+00 : f32
    %88 = vector.broadcast %cst_45 : f32 to vector<16x128xf32>
    %89 = arith.cmpf ogt, %87, %88 : vector<16x128xf32>
    %90 = math.exp %87 : vector<16x128xf32>
    %cst_46 = arith.constant 1.000000e+00 : f32
    %91 = vector.broadcast %cst_46 : f32 to vector<16x128xf32>
    %92 = arith.subf %90, %91 : vector<16x128xf32>
    %93 = arith.select %89, %87, %92 : vector<16x128xi1>, vector<16x128xf32>
    %94 = arith.truncf %93 : vector<16x128xf32> to vector<16x128xbf16>
    %c1_47 = arith.constant 1 : index
    %c0_48 = arith.constant 0 : index
    %c0_49 = arith.constant 0 : index
    %95 = vector.load %arg5[%c1_47, %c0_48, %c0_49] : memref<4x16x128xbf16, #tpu.memory_space<vmem>>, vector<1x16x128xbf16>
    %96 = vector.shape_cast %95 : vector<1x16x128xbf16> to vector<16x128xbf16>
    %97 = vector.shape_cast %94 : vector<16x128xbf16> to vector<1x16x128xbf16>
    tpu.vector_store %arg5[%c1_47, %c0_48, %c0_49], %97 {strides = array<i32>} : memref<4x16x128xbf16, #tpu.memory_space<vmem>>, vector<1x16x128xbf16>,
    %98 = vector.broadcast %66 : vector<16x1xf32> to vector<16x128xf32>
    %99 = arith.mulf %14, %98 : vector<16x128xf32>
    %100 = vector.broadcast %69 : vector<16x1xf32> to vector<16x128xf32>
    %101 = arith.addf %99, %100 : vector<16x128xf32>
    %cst_50 = arith.constant 0.000000e+00 : f32
    %102 = vector.broadcast %cst_50 : f32 to vector<16x128xf32>
    %103 = arith.cmpf ogt, %101, %102 : vector<16x128xf32>
    %104 = math.exp %101 : vector<16x128xf32>
    %cst_51 = arith.constant 1.000000e+00 : f32
    %105 = vector.broadcast %cst_51 : f32 to vector<16x128xf32>
    %106 = arith.subf %104, %105 : vector<16x128xf32>
    %107 = arith.select %103, %101, %106 : vector<16x128xi1>, vector<16x128xf32>
    %108 = arith.truncf %107 : vector<16x128xf32> to vector<16x128xbf16>
    %c2_52 = arith.constant 2 : index
    %c0_53 = arith.constant 0 : index
    %c0_54 = arith.constant 0 : index
    %109 = vector.load %arg5[%c2_52, %c0_53, %c0_54] : memref<4x16x128xbf16, #tpu.memory_space<vmem>>, vector<1x16x128xbf16>
    %110 = vector.shape_cast %109 : vector<1x16x128xbf16> to vector<16x128xbf16>
    %111 = vector.shape_cast %108 : vector<16x128xbf16> to vector<1x16x128xbf16>
    tpu.vector_store %arg5[%c2_52, %c0_53, %c0_54], %111 {strides = array<i32>} : memref<4x16x128xbf16, #tpu.memory_space<vmem>>, vector<1x16x128xbf16>,
    %112 = vector.broadcast %66 : vector<16x1xf32> to vector<16x128xf32>
    %113 = arith.mulf %19, %112 : vector<16x128xf32>
    %114 = vector.broadcast %69 : vector<16x1xf32> to vector<16x128xf32>
    %115 = arith.addf %113, %114 : vector<16x128xf32>
    %cst_55 = arith.constant 0.000000e+00 : f32
    %116 = vector.broadcast %cst_55 : f32 to vector<16x128xf32>
    %117 = arith.cmpf ogt, %115, %116 : vector<16x128xf32>
    %118 = math.exp %115 : vector<16x128xf32>
    %cst_56 = arith.constant 1.000000e+00 : f32
    %119 = vector.broadcast %cst_56 : f32 to vector<16x128xf32>
    %120 = arith.subf %118, %119 : vector<16x128xf32>
    %121 = arith.select %117, %115, %120 : vector<16x128xi1>, vector<16x128xf32>
    %122 = arith.truncf %121 : vector<16x128xf32> to vector<16x128xbf16>
    %c3_57 = arith.constant 3 : index
    %c0_58 = arith.constant 0 : index
    %c0_59 = arith.constant 0 : index
    %123 = vector.load %arg5[%c3_57, %c0_58, %c0_59] : memref<4x16x128xbf16, #tpu.memory_space<vmem>>, vector<1x16x128xbf16>
    %124 = vector.shape_cast %123 : vector<1x16x128xbf16> to vector<16x128xbf16>
    %125 = vector.shape_cast %122 : vector<16x128xbf16> to vector<1x16x128xbf16>
    tpu.vector_store %arg5[%c3_57, %c0_58, %c0_59], %125 {strides = array<i32>} : memref<4x16x128xbf16, #tpu.memory_space<vmem>>, vector<1x16x128xbf16>,
    return
  }
  func.func @transform_0(%arg0: i32) -> (i32, i32, i32) {
    %c0_i32 = arith.constant 0 : i32
    %c0_i32_0 = arith.constant 0 : i32
    %c0_i32_1 = arith.constant 0 : i32
    %c0_i32_2 = arith.constant 0 : i32
    return %c0_i32, %c0_i32_0, %c0_i32_1 : i32, i32, i32
  }
  func.func @transform_1(%arg0: i32) -> (i32, i32, i32) {
    %c0_i32 = arith.constant 0 : i32
    %c0_i32_0 = arith.constant 0 : i32
    %c0_i32_1 = arith.constant 0 : i32
    %c0_i32_2 = arith.constant 0 : i32
    return %c0_i32, %c0_i32_0, %c0_i32_1 : i32, i32, i32
  }
  func.func @transform_2(%arg0: i32) -> (i32, i32) {
    %c0_i32 = arith.constant 0 : i32
    %c0_i32_0 = arith.constant 0 : i32
    %c0_i32_1 = arith.constant 0 : i32
    return %c0_i32, %c0_i32_0 : i32, i32
  }
  func.func @transform_3(%arg0: i32) -> (i32, i32) {
    %c0_i32 = arith.constant 0 : i32
    %c0_i32_0 = arith.constant 0 : i32
    %c0_i32_1 = arith.constant 0 : i32
    return %c0_i32, %c0_i32_0 : i32, i32
  }
  func.func @transform_4(%arg0: i32) -> (i32, i32, i32) {
    %c0_i32 = arith.constant 0 : i32
    %c0_i32_0 = arith.constant 0 : i32
    %c0_i32_1 = arith.constant 0 : i32
    %c0_i32_2 = arith.constant 0 : i32
    return %c0_i32, %c0_i32_0, %c0_i32_1 : i32, i32, i32
  }
}

module attributes {stable_mosaic.version = 11 : i64} {
  func.func @_deconv_tanh_kernel(%arg0: i32, %arg1: memref<1x64x512xbf16, #tpu.memory_space<vmem>>, %arg2: memref<1x3x64xbf16, #tpu.memory_space<vmem>>, %arg3: memref<1x3x512xf32, #tpu.memory_space<vmem>>) attributes {dimension_semantics = [#tpu.dimension_semantics<parallel>], iteration_bounds = array<i64: 4>, scalar_prefetch = 0 : i64, scratch_operands = 0 : i64, tpu.core_type = #tpu.core_type<tc>, window_params = [{transform_indices = @transform_0, window_bounds = array<i64: 1, 64, 512>}, {transform_indices = @transform_1, window_bounds = array<i64: 1, 3, 64>}, {transform_indices = @transform_2, window_bounds = array<i64: 1, 3, 512>}]} {
    %c0 = arith.constant 0 : index
    %c0_0 = arith.constant 0 : index
    %c0_1 = arith.constant 0 : index
    %0 = vector.load %arg2[%c0, %c0_0, %c0_1] : memref<1x3x64xbf16, #tpu.memory_space<vmem>>, vector<1x3x64xbf16>
    %1 = vector.shape_cast %0 : vector<1x3x64xbf16> to vector<3x64xbf16>
    %c0_2 = arith.constant 0 : index
    %c0_3 = arith.constant 0 : index
    %c0_4 = arith.constant 0 : index
    %2 = vector.load %arg1[%c0_2, %c0_3, %c0_4] : memref<1x64x512xbf16, #tpu.memory_space<vmem>>, vector<1x64x512xbf16>
    %3 = vector.shape_cast %2 : vector<1x64x512xbf16> to vector<64x512xbf16>
    %cst = arith.constant dense<0.000000e+00> : vector<3x512xf32>
    %4 = tpu.matmul %1, %3, %cst {dimension_numbers = #tpu.dot_dimension_numbers<[1], [0], [0], [1], [0, 0, 1, 1], [], []>} : vector<3x64xbf16>, vector<64x512xbf16>, vector<3x512xf32> -> vector<3x512xf32>
    %5 = math.tanh %4 : vector<3x512xf32>
    %c0_5 = arith.constant 0 : index
    %c0_6 = arith.constant 0 : index
    %c0_7 = arith.constant 0 : index
    %6 = vector.load %arg3[%c0_5, %c0_6, %c0_7] : memref<1x3x512xf32, #tpu.memory_space<vmem>>, vector<1x3x512xf32>
    %7 = vector.shape_cast %6 : vector<1x3x512xf32> to vector<3x512xf32>
    %8 = vector.shape_cast %5 : vector<3x512xf32> to vector<1x3x512xf32>
    tpu.vector_store %arg3[%c0_5, %c0_6, %c0_7], %8 {strides = array<i32>} : memref<1x3x512xf32, #tpu.memory_space<vmem>>, vector<1x3x512xf32>,
    return
  }
  func.func @transform_0(%arg0: i32) -> (i32, i32, i32) {
    %c0_i32 = arith.constant 0 : i32
    %c0_i32_0 = arith.constant 0 : i32
    %c0_i32_1 = arith.constant 0 : i32
    return %arg0, %c0_i32, %c0_i32_0 : i32, i32, i32
  }
  func.func @transform_1(%arg0: i32) -> (i32, i32, i32) {
    %c0_i32 = arith.constant 0 : i32
    %c0_i32_0 = arith.constant 0 : i32
    %c0_i32_1 = arith.constant 0 : i32
    return %arg0, %c0_i32, %c0_i32_0 : i32, i32, i32
  }
  func.func @transform_2(%arg0: i32) -> (i32, i32, i32) {
    %c0_i32 = arith.constant 0 : i32
    %c0_i32_0 = arith.constant 0 : i32
    %c0_i32_1 = arith.constant 0 : i32
    return %arg0, %c0_i32, %c0_i32_0 : i32, i32, i32
  }
}

</mosaic_0001>

<llo_original>
// kernel: gang_forward.4
$region0: #{gang_forward.4}
  #allocation0 [shape = 'u32[]', space=smem, size = 0x4, offset = 0x4, fixed_abs, tag = 'smem constant byte address 0x4 - core index']
  #allocation1 [shape = 'u32[144,128]{1,0:T(1,128)}', space=vmem, size = 0x12000, scoped, tag = 'internal scratch']
  %s0 = inlined_call_operand.vmem [shape: bf16[2,16], index: 0, kind: input, shape index: {}]
  %s1 = inlined_call_operand.hbm [shape: bf16[16,512], index: 1, kind: input, shape index: {}]
  %s2 = inlined_call_operand.hbm [shape: f32[1,512], index: 2, kind: input, shape index: {}]
  %s3 = inlined_call_operand.vmem [shape: f32[2,512], index: 3, kind: output, shape index: {}]
  %s4 = sld [smem:[#allocation0]]
  $region30: #{gang_forward.4} parent=0
    _
  %s6 = ssub.s32 1, %s4
  %s7 = scalar_select 0, %s6, %s4
  $region1: #{gang_forward.4} parent=0
    #allocation2 [shape = 'u8[16384]{0}', space=vmem, size = 0x4000, scoped, tag = 'input window, operand 1, single buffered']
    #allocation3 [shape = 's32[1]{0}', space=sflag, size = 0x4, scoped, tag = 'scoped memory for gang_forward.4']
    #allocation4 [shape = 'u8[2048]{0}', space=vmem, size = 0x800, scoped, tag = 'input window, operand 2, single buffered']
    #allocation5 [shape = 's32[1]{0}', space=sflag, size = 0x4, scoped, tag = 'scoped memory for gang_forward.4']
    %8 = vsyncpa [#allocation3], 0
    %9 = vsyncpa [#allocation5], 0
    // Predicated region
    $region2: #{gang_forward.4} parent=1 // pred_check
      _
    $region3: #{gang_forward.4} parent=1 // pred_check_branch
      %11 = sbr.rel (0) target = $region5
    $region4: #{gang_forward.4} parent=1 // pred_region
      _
    $region5: #{gang_forward.4} parent=1 // pred_fallthru
      _
    // Predicated region
    $region6: #{gang_forward.4} parent=1 // pred_check
      _
    $region7: #{gang_forward.4} parent=1 // pred_check_branch
      %13 = sbr.rel (0) target = $region9
    $region8: #{gang_forward.4} parent=1 // pred_region
      %s15 = ssub.s32 512, 512
      %16 = vsyncadd [#allocation3], %s15
      %s17 = sshll.u32 [#allocation2], 4
      %s18 = int_to_ptr.vmem [resolvable:$true] %s17
      %23 = dma.hbm_to_vmem [thread:$0]  %s1, 512, %s18, [#allocation3], 256, 256, 16
    $region9: #{gang_forward.4} parent=1 // pred_fallthru
      _
    // Predicated region
    $region10: #{gang_forward.4} parent=1 // pred_check
      _
    $region11: #{gang_forward.4} parent=1 // pred_check_branch
      %25 = sbr.rel (0) target = $region13
    $region12: #{gang_forward.4} parent=1 // pred_region
      %s27 = ssub.s32 64, 64
      %28 = vsyncadd [#allocation5], %s27
      %s30 = sshll.u32 [#allocation4], 4
      %s31 = int_to_ptr.vmem [resolvable:$true] %s30
      %33 = dma.hbm_to_vmem [thread:$0]  %s2, 64, %s31, [#allocation5]
    $region13: #{gang_forward.4} parent=1 // pred_fallthru
      _
    // Predicated region
    $region14: #{gang_forward.4} parent=1 // pred_check
      _
    $region15: #{gang_forward.4} parent=1 // pred_check_branch
      %35 = sbr.rel (0) target = $region17
    $region16: #{gang_forward.4} parent=1 // pred_region
      %36 = dma.done [#allocation3], 512
    $region17: #{gang_forward.4} parent=1 // pred_fallthru
      _
    // Predicated region
    $region18: #{gang_forward.4} parent=1 // pred_check
      _
    $region19: #{gang_forward.4} parent=1 // pred_check_branch
      %38 = sbr.rel (0) target = $region21
    $region20: #{gang_forward.4} parent=1 // pred_region
      %39 = dma.done [#allocation5], 64
    $region21: #{gang_forward.4} parent=1 // pred_fallthru
      _
    %v41 = vld [vmem:[%s0] sm:$0x1]
    %v42 = vld [vmem:[#allocation2] sm:$0xff]
    %v43 = vld [vmem:[#allocation2 + $0x8] sm:$0xff]
    %v44 = vld [vmem:[#allocation2 + $0x10] sm:$0xff]
    %v45 = vld [vmem:[#allocation2 + $0x18] sm:$0xff]
    %v46 = vld [vmem:[#allocation4] sm:$0xf]
    %v48 = vlaneseq
    %v49 = vshrl.u32 %v48, 7
    %v50 = vsub.s32 0, %v49
    %v51 = vrot.slane %v46, %v50
    %v52 = vlaneseq
    %v53 = vshrl.u32 %v52, 7
    %v54 = vsub.s32 1, %v53
    %v55 = vrot.slane %v46, %v54
    %v56 = vlaneseq
    %v57 = vshrl.u32 %v56, 7
    %v58 = vsub.s32 2, %v57
    %v59 = vrot.slane %v46, %v58
    %v60 = vlaneseq
    %v61 = vshrl.u32 %v60, 7
    %v62 = vsub.s32 3, %v61
    %v63 = vrot.slane %v46, %v62
    %v72 = vunpack.c.l.b16 %v42
    %v73 = vunpack.c.h.b16 %v42
    %v74 = vunpack.c.l.b16 %v43
    %v75 = vunpack.c.h.b16 %v43
    %v76 = vunpack.c.l.b16 %v44
    %v77 = vunpack.c.h.b16 %v44
    %v78 = vunpack.c.l.b16 %v45
    %v79 = vunpack.c.h.b16 %v45
    %v80 = vpack.c.b16 %v76, %v72
    %v81 = vpack.c.b16 %v77, %v73
    %v82 = vpack.c.b16 %v78, %v74
    %v83 = vpack.c.b16 %v79, %v75
    %vm88 = vcmask 130048
    %v90 = vsel %vm88, %v41, 0
    %92 = vmatprep.subr.bf16.mxu0 %v81
    %93 = vmatpush1.bf16.msra.mxu0 %v80
    %94 = vmatprep.subr.bf16.mxu0 0
    %95 = vmatpush1.bf16.msra.mxu0 0
    %96 = vmatprep.subr.bf16.mxu0 0
    %97 = vmatpush1.bf16.msra.mxu0 0
    %98 = vmatprep.subr.bf16.mxu0 0
    %99 = vmatpush1.bf16.msra.mxu0 0
    %100 = vmatprep.subr.bf16.mxu0 0
    %101 = vmatpush1.bf16.msra.mxu0 0
    %102 = vmatprep.subr.bf16.mxu0 0
    %103 = vmatpush1.bf16.msra.mxu0 0
    %104 = vmatprep.subr.bf16.mxu0 0
    %105 = vmatpush1.bf16.msra.mxu0 0
    %106 = vmatprep.subr.bf16.mxu0 0
    %107 = vmatpush1.bf16.msra.mxu0 0
    %108 = vmatprep.subr.bf16.mxu0 0
    %109 = vmatpush1.bf16.msra.mxu0 0
    %110 = vmatprep.subr.bf16.mxu0 0
    %111 = vmatpush1.bf16.msra.mxu0 0
    %112 = vmatprep.subr.bf16.mxu0 0
    %113 = vmatpush1.bf16.msra.mxu0 0
    %114 = vmatprep.subr.bf16.mxu0 0
    %115 = vmatpush1.bf16.msra.mxu0 0
    %116 = vmatprep.subr.bf16.mxu0 0
    %117 = vmatpush1.bf16.msra.mxu0 0
    %118 = vmatprep.subr.bf16.mxu0 0
    %119 = vmatpush1.bf16.msra.mxu0 0
    %120 = vmatprep.subr.bf16.mxu0 0
    %121 = vmatpush1.bf16.msra.mxu0 0
    %122 = vmatprep.subr.bf16.mxu0 0
    %123 = vmatpush1.bf16.msra.mxu0 0
    %124 = vmatprep.mubr.bf16.mxu0 0
    %125 = vmatmul.mubr.bf16.gmra.mrb[0].mxu0 %v90
    %v126 = vpop.f32.mrb[0].mxu0
    %v127 = vadd.f32 %v51, %v126
    %v128 = vpop.f32.mrb[0].mxu0
    %v129 = vadd.f32 %v55, %v128
    %v130 = vpop.f32.mrb[0].mxu0
    %v131 = vpop.f32.mrb[0].mxu0
    %132 = vdwg.mxu0
    %133 = vmatprep.subr.bf16.mxu0 %v83
    %134 = vmatpush1.bf16.msra.mxu0 %v82
    %135 = vmatprep.subr.bf16.mxu0 0
    %136 = vmatpush1.bf16.msra.mxu0 0
    %137 = vmatprep.subr.bf16.mxu0 0
    %138 = vmatpush1.bf16.msra.mxu0 0
    %139 = vmatprep.subr.bf16.mxu0 0
    %140 = vmatpush1.bf16.msra.mxu0 0
    %141 = vmatprep.subr.bf16.mxu0 0
    %142 = vmatpush1.bf16.msra.mxu0 0
    %143 = vmatprep.subr.bf16.mxu0 0
    %144 = vmatpush1.bf16.msra.mxu0 0
    %145 = vmatprep.subr.bf16.mxu0 0
    %146 = vmatpush1.bf16.msra.mxu0 0
    %147 = vmatprep.subr.bf16.mxu0 0
    %148 = vmatpush1.bf16.msra.mxu0 0
    %149 = vmatprep.subr.bf16.mxu0 0
    %150 = vmatpush1.bf16.msra.mxu0 0
    %151 = vmatprep.subr.bf16.mxu0 0
    %152 = vmatpush1.bf16.msra.mxu0 0
    %153 = vmatprep.subr.bf16.mxu0 0
    %154 = vmatpush1.bf16.msra.mxu0 0
    %155 = vmatprep.subr.bf16.mxu0 0
    %156 = vmatpush1.bf16.msra.mxu0 0
    %157 = vmatprep.subr.bf16.mxu0 0
    %158 = vmatpush1.bf16.msra.mxu0 0
    %159 = vmatprep.subr.bf16.mxu0 0
    %160 = vmatpush1.bf16.msra.mxu0 0
    %161 = vmatprep.subr.bf16.mxu0 0
    %162 = vmatpush1.bf16.msra.mxu0 0
    %163 = vmatprep.subr.bf16.mxu0 0
    %164 = vmatpush1.bf16.msra.mxu0 0
    %165 = vmatprep.mubr.bf16.mxu0 0
    %166 = vmatmul.mubr.bf16.gmra.mrb[0].mxu0 %v90
    %v167 = vpop.f32.mrb[0].mxu0
    %v168 = vadd.f32 %v59, %v167
    %v169 = vpop.f32.mrb[0].mxu0
    %v170 = vadd.f32 %v63, %v169
    %v171 = vpop.f32.mrb[0].mxu0
    %v172 = vpop.f32.mrb[0].mxu0
    %173 = vdwg.mxu0
    %v178 = vcombine.low %v127, %v129
    %v179 = vcombine.low %v168, %v170
    %v181 = vunpack.c.l.s4 1983009808
    %v182 = vunpack.c.0.s8 %v181
    %v183 = vlaneseq
    %v184 = vshrl.u32 %v183, 7
    %v185 = vsub.s32 %v182, %v184
    %v186 = vrot.slane %v178, %v185
    %v188 = vunpack.c.l.s4 1983009808
    %v189 = vunpack.c.0.s8 %v188
    %v190 = vlaneseq
    %v191 = vshrl.u32 %v190, 7
    %v192 = vsub.s32 %v189, %v191
    %v193 = vrot.slane %v179, %v192
    %v194 = vcombine.low %v186, %v193
    %196 = vst [vmem:[%s3] sm:$0xff] %v194
    // Predicated region
    $region22: #{gang_forward.4} parent=1 // pred_check
      _
    $region23: #{gang_forward.4} parent=1 // pred_check_branch
      %198 = sbr.rel (0) target = $region25
    $region24: #{gang_forward.4} parent=1 // pred_region
      _
    $region25: #{gang_forward.4} parent=1 // pred_fallthru
      _
    // Predicated region
    $region26: #{gang_forward.4} parent=1 // pred_check
      _
    $region27: #{gang_forward.4} parent=1 // pred_check_branch
      %200 = sbr.rel (0) target = $region29
    $region28: #{gang_forward.4} parent=1 // pred_region
      _
    $region29: #{gang_forward.4} parent=1 // pred_fallthru
      _
    %201 = vsyncpa [#allocation3], 1
    %202 = vsyncpa [#allocation5], 1

// kernel: gang_forward.5
$region0: #{gang_forward.5}
  #allocation0 [shape = 'u32[]', space=smem, size = 0x4, offset = 0x4, fixed_abs, tag = 'smem constant byte address 0x4 - core index']
  #allocation1 [shape = 'u32[144,128]{1,0:T(1,128)}', space=vmem, size = 0x12000, scoped, tag = 'internal scratch']
  %s0 = inlined_call_operand.vmem [shape: bf16[4,128,32], index: 0, kind: input, shape index: {}]
  %s1 = inlined_call_operand.vmem [shape: bf16[4,32,128], index: 1, kind: input, shape index: {}]
  %s2 = inlined_call_operand.vmem [shape: f32[32,1], index: 2, kind: input, shape index: {}]
  %s3 = inlined_call_operand.vmem [shape: f32[32,1], index: 3, kind: input, shape index: {}]
  %s4 = inlined_call_operand.vmem [shape: bf16[4,32,32], index: 4, kind: output, shape index: {}]
  %s5 = sld [smem:[#allocation0]]
  $region26: #{gang_forward.5} parent=0
    _
  %s7 = ssub.s32 1, %s5
  %s8 = scalar_select 0, %s7, %s5
  // Predicated region
  $region2: #{gang_forward.5} parent=0 // pred_check
    _
  $region3: #{gang_forward.5} parent=0 // pred_check_branch
    %10 = sbr.rel (0) target = $region5
  $region4: #{gang_forward.5} parent=0 // pred_region
    _
  $region5: #{gang_forward.5} parent=0 // pred_fallthru
    _
  // Predicated region
  $region6: #{gang_forward.5} parent=0 // pred_check
    _
  $region7: #{gang_forward.5} parent=0 // pred_check_branch
    %12 = sbr.rel (0) target = $region9
  $region8: #{gang_forward.5} parent=0 // pred_region
    _
  $region9: #{gang_forward.5} parent=0 // pred_fallthru
    _
  // Predicated region
  $region10: #{gang_forward.5} parent=0 // pred_check
    _
  $region11: #{gang_forward.5} parent=0 // pred_check_branch
    %14 = sbr.rel (0) target = $region13
  $region12: #{gang_forward.5} parent=0 // pred_region
    _
  $region13: #{gang_forward.5} parent=0 // pred_fallthru
    _
  // Predicated region
  $region14: #{gang_forward.5} parent=0 // pred_check
    _
  $region15: #{gang_forward.5} parent=0 // pred_check_branch
    %16 = sbr.rel (0) target = $region17
  $region16: #{gang_forward.5} parent=0 // pred_region
    _
  $region17: #{gang_forward.5} parent=0 // pred_fallthru
    _
  %v18 = vld [vmem:[%s1] sm:$0xf]
  %v19 = vld [vmem:[%s1 + $0x4] sm:$0xf]
  %v20 = vld [vmem:[%s1 + $0x8] sm:$0xf]
  %v21 = vld [vmem:[%s1 + $0xc] sm:$0xf]
  %v22 = vld [vmem:[%s0] sm:$0xf]
  %v23 = vld [vmem:[%s0 + $0x4] sm:$0xf]
  %v24 = vld [vmem:[%s0 + $0x8] sm:$0xf]
  %v25 = vld [vmem:[%s0 + $0xc] sm:$0xf]
  %v26 = vld [vmem:[%s0 + $0x10] sm:$0xf]
  %v27 = vld [vmem:[%s0 + $0x14] sm:$0xf]
  %v28 = vld [vmem:[%s0 + $0x18] sm:$0xf]
  %v29 = vld [vmem:[%s0 + $0x1c] sm:$0xf]
  %v30 = vld [vmem:[%s0 + $0x20] sm:$0xf]
  %v31 = vld [vmem:[%s0 + $0x24] sm:$0xf]
  %v32 = vld [vmem:[%s0 + $0x28] sm:$0xf]
  %v33 = vld [vmem:[%s0 + $0x2c] sm:$0xf]
  %v34 = vld [vmem:[%s0 + $0x30] sm:$0xf]
  %v35 = vld [vmem:[%s0 + $0x34] sm:$0xf]
  %v36 = vld [vmem:[%s0 + $0x38] sm:$0xf]
  %v37 = vld [vmem:[%s0 + $0x3c] sm:$0xf]
  %v42 = vunpack.c.l.b16 %v18
  %v43 = vunpack.c.l.b16 %v19
  %v44 = vunpack.c.l.b16 %v20
  %v45 = vunpack.c.l.b16 %v21
  %v46 = vpack.c.b16 %v43, %v42
  %v47 = vpack.c.b16 %v45, %v44
  %v66 = vunpack.c.l.b16 %v22
  %v67 = vunpack.c.l.b16 %v23
  %v68 = vunpack.c.l.b16 %v24
  %v69 = vunpack.c.l.b16 %v25
  %v70 = vunpack.c.l.b16 %v26
  %v71 = vunpack.c.l.b16 %v27
  %v72 = vunpack.c.l.b16 %v28
  %v73 = vunpack.c.l.b16 %v29
  %v74 = vunpack.c.l.b16 %v30
  %v75 = vunpack.c.l.b16 %v31
  %v76 = vunpack.c.l.b16 %v32
  %v77 = vunpack.c.l.b16 %v33
  %v78 = vunpack.c.l.b16 %v34
  %v79 = vunpack.c.l.b16 %v35
  %v80 = vunpack.c.l.b16 %v36
  %v81 = vunpack.c.l.b16 %v37
  %v82 = vpack.c.b16 %v67, %v66
  %v83 = vpack.c.b16 %v69, %v68
  %v84 = vpack.c.b16 %v71, %v70
  %v85 = vpack.c.b16 %v73, %v72
  %v86 = vpack.c.b16 %v75, %v74
  %v87 = vpack.c.b16 %v77, %v76
  %v88 = vpack.c.b16 %v79, %v78
  %v89 = vpack.c.b16 %v81, %v80
  %98 = vmatprep.subr.bf16.mxu0 0
  %99 = vmatpush1.bf16.msra.mxu0 %v82
  %100 = vmatprep.subr.bf16.mxu0 0
  %101 = vmatpush1.bf16.msra.mxu0 %v83
  %102 = vmatprep.subr.bf16.mxu0 0
  %103 = vmatpush1.bf16.msra.mxu0 %v84
  %104 = vmatprep.subr.bf16.mxu0 0
  %105 = vmatpush1.bf16.msra.mxu0 %v85
  %106 = vmatprep.subr.bf16.mxu0 0
  %107 = vmatpush1.bf16.msra.mxu0 %v86
  %108 = vmatprep.subr.bf16.mxu0 0
  %109 = vmatpush1.bf16.msra.mxu0 %v87
  %110 = vmatprep.subr.bf16.mxu0 0
  %111 = vmatpush1.bf16.msra.mxu0 %v88
  %112 = vmatprep.subr.bf16.mxu0 0
  %113 = vmatpush1.bf16.msra.mxu0 %v89
  %114 = vmatprep.subr.bf16.mxu0 0
  %115 = vmatpush1.bf16.msra.mxu0 0
  %116 = vmatprep.subr.bf16.mxu0 0
  %117 = vmatpush1.bf16.msra.mxu0 0
  %118 = vmatprep.subr.bf16.mxu0 0
  %119 = vmatpush1.bf16.msra.mxu0 0
  %120 = vmatprep.subr.bf16.mxu0 0
  %121 = vmatpush1.bf16.msra.mxu0 0
  %122 = vmatprep.subr.bf16.mxu0 0
  %123 = vmatpush1.bf16.msra.mxu0 0
  %124 = vmatprep.subr.bf16.mxu0 0
  %125 = vmatpush1.bf16.msra.mxu0 0
  %126 = vmatprep.subr.bf16.mxu0 0
  %127 = vmatpush1.bf16.msra.mxu0 0
  %128 = vmatprep.subr.bf16.mxu0 0
  %129 = vmatpush1.bf16.msra.mxu0 0
  %130 = vmatprep.mubr.bf16.mxu0 0
  %131 = vmatmul.mubr.bf16.gmra.mrb[0].mxu0 %v46
  %v132 = vpop.f32.mrb[0].mxu0
  %v133 = vadd.f32 0.0, %v132
  %v134 = vpop.f32.mrb[0].mxu0
  %v135 = vpop.f32.mrb[0].mxu0
  %v136 = vadd.f32 0.0, %v135
  %v137 = vpop.f32.mrb[0].mxu0
  %138 = vmatprep.mubr.bf16.mxu0 0
  %139 = vmatmul.mubr.bf16.gmra.mrb[0].mxu0 %v47
  %v140 = vpop.f32.mrb[0].mxu0
  %v141 = vadd.f32 0.0, %v140
  %v142 = vpop.f32.mrb[0].mxu0
  %v143 = vpop.f32.mrb[0].mxu0
  %v144 = vadd.f32 0.0, %v143
  %v145 = vpop.f32.mrb[0].mxu0
  %146 = vdwg.mxu0
  %s147 = scalar_lea.vmem %s1, 16
  %v148 = vld [vmem:[%s147] sm:$0xf]
  %v149 = vld [vmem:[%s147 + $0x4] sm:$0xf]
  %v150 = vld [vmem:[%s147 + $0x8] sm:$0xf]
  %v151 = vld [vmem:[%s147 + $0xc] sm:$0xf]
  %s152 = scalar_lea.vmem %s0, 64
  %v153 = vld [vmem:[%s152] sm:$0xf]
  %v154 = vld [vmem:[%s152 + $0x4] sm:$0xf]
  %v155 = vld [vmem:[%s152 + $0x8] sm:$0xf]
  %v156 = vld [vmem:[%s152 + $0xc] sm:$0xf]
  %v157 = vld [vmem:[%s152 + $0x10] sm:$0xf]
  %v158 = vld [vmem:[%s152 + $0x14] sm:$0xf]
  %v159 = vld [vmem:[%s152 + $0x18] sm:$0xf]
  %v160 = vld [vmem:[%s152 + $0x1c] sm:$0xf]
  %v161 = vld [vmem:[%s152 + $0x20] sm:$0xf]
  %v162 = vld [vmem:[%s152 + $0x24] sm:$0xf]
  %v163 = vld [vmem:[%s152 + $0x28] sm:$0xf]
  %v164 = vld [vmem:[%s152 + $0x2c] sm:$0xf]
  %v165 = vld [vmem:[%s152 + $0x30] sm:$0xf]
  %v166 = vld [vmem:[%s152 + $0x34] sm:$0xf]
  %v167 = vld [vmem:[%s152 + $0x38] sm:$0xf]
  %v168 = vld [vmem:[%s152 + $0x3c] sm:$0xf]
  %v173 = vunpack.c.l.b16 %v148
  %v174 = vunpack.c.l.b16 %v149
  %v175 = vunpack.c.l.b16 %v150
  %v176 = vunpack.c.l.b16 %v151
  %v177 = vpack.c.b16 %v174, %v173
  %v178 = vpack.c.b16 %v176, %v175
  %v197 = vunpack.c.l.b16 %v153
  %v198 = vunpack.c.l.b16 %v154
  %v199 = vunpack.c.l.b16 %v155
  %v200 = vunpack.c.l.b16 %v156
  %v201 = vunpack.c.l.b16 %v157
  %v202 = vunpack.c.l.b16 %v158
  %v203 = vunpack.c.l.b16 %v159
  %v204 = vunpack.c.l.b16 %v160
  %v205 = vunpack.c.l.b16 %v161
  %v206 = vunpack.c.l.b16 %v162
  %v207 = vunpack.c.l.b16 %v163
  %v208 = vunpack.c.l.b16 %v164
  %v209 = vunpack.c.l.b16 %v165
  %v210 = vunpack.c.l.b16 %v166
  %v211 = vunpack.c.l.b16 %v167
  %v212 = vunpack.c.l.b16 %v168
  %v213 = vpack.c.b16 %v198, %v197
  %v214 = vpack.c.b16 %v200, %v199
  %v215 = vpack.c.b16 %v202, %v201
  %v216 = vpack.c.b16 %v204, %v203
  %v217 = vpack.c.b16 %v206, %v205
  %v218 = vpack.c.b16 %v208, %v207
  %v219 = vpack.c.b16 %v210, %v209
  %v220 = vpack.c.b16 %v212, %v211
  %229 = vmatprep.subr.bf16.mxu0 0
  %230 = vmatpush1.bf16.msra.mxu0 %v213
  %231 = vmatprep.subr.bf16.mxu0 0
  %232 = vmatpush1.bf16.msra.mxu0 %v214
  %233 = vmatprep.subr.bf16.mxu0 0
  %234 = vmatpush1.bf16.msra.mxu0 %v215
  %235 = vmatprep.subr.bf16.mxu0 0
  %236 = vmatpush1.bf16.msra.mxu0 %v216
  %237 = vmatprep.subr.bf16.mxu0 0
  %238 = vmatpush1.bf16.msra.mxu0 %v217
  %239 = vmatprep.subr.bf16.mxu0 0
  %240 = vmatpush1.bf16.msra.mxu0 %v218
  %241 = vmatprep.subr.bf16.mxu0 0
  %242 = vmatpush1.bf16.msra.mxu0 %v219
  %243 = vmatprep.subr.bf16.mxu0 0
  %244 = vmatpush1.bf16.msra.mxu0 %v220
  %245 = vmatprep.subr.bf16.mxu0 0
  %246 = vmatpush1.bf16.msra.mxu0 0
  %247 = vmatprep.subr.bf16.mxu0 0
  %248 = vmatpush1.bf16.msra.mxu0 0
  %249 = vmatprep.subr.bf16.mxu0 0
  %250 = vmatpush1.bf16.msra.mxu0 0
  %251 = vmatprep.subr.bf16.mxu0 0
  %252 = vmatpush1.bf16.msra.mxu0 0
  %253 = vmatprep.subr.bf16.mxu0 0
  %254 = vmatpush1.bf16.msra.mxu0 0
  %255 = vmatprep.subr.bf16.mxu0 0
  %256 = vmatpush1.bf16.msra.mxu0 0
  %257 = vmatprep.subr.bf16.mxu0 0
  %258 = vmatpush1.bf16.msra.mxu0 0
  %259 = vmatprep.subr.bf16.mxu0 0
  %260 = vmatpush1.bf16.msra.mxu0 0
  %261 = vmatprep.mubr.bf16.mxu0 0
  %262 = vmatmul.mubr.bf16.gmra.mrb[0].mxu0 %v177
  %v263 = vpop.f32.mrb[0].mxu0
  %v264 = vadd.f32 0.0, %v263
  %v265 = vpop.f32.mrb[0].mxu0
  %v266 = vpop.f32.mrb[0].mxu0
  %v267 = vadd.f32 0.0, %v266
  %v268 = vpop.f32.mrb[0].mxu0
  %269 = vmatprep.mubr.bf16.mxu0 0
  %270 = vmatmul.mubr.bf16.gmra.mrb[0].mxu0 %v178
  %v271 = vpop.f32.mrb[0].mxu0
  %v272 = vadd.f32 0.0, %v271
  %v273 = vpop.f32.mrb[0].mxu0
  %v274 = vpop.f32.mrb[0].mxu0
  %v275 = vadd.f32 0.0, %v274
  %v276 = vpop.f32.mrb[0].mxu0
  %277 = vdwg.mxu0
  %s278 = scalar_lea.vmem %s1, 32
  %v279 = vld [vmem:[%s278] sm:$0xf]
  %v280 = vld [vmem:[%s278 + $0x4] sm:$0xf]
  %v281 = vld [vmem:[%s278 + $0x8] sm:$0xf]
  %v282 = vld [vmem:[%s278 + $0xc] sm:$0xf]
  %s283 = scalar_lea.vmem %s0, 128
  %v284 = vld [vmem:[%s283] sm:$0xf]
  %v285 = vld [vmem:[%s283 + $0x4] sm:$0xf]
  %v286 = vld [vmem:[%s283 + $0x8] sm:$0xf]
  %v287 = vld [vmem:[%s283 + $0xc] sm:$0xf]
  %v288 = vld [vmem:[%s283 + $0x10] sm:$0xf]
  %v289 = vld [vmem:[%s283 + $0x14] sm:$0xf]
  %v290 = vld [vmem:[%s283 + $0x18] sm:$0xf]
  %v291 = vld [vmem:[%s283 + $0x1c] sm:$0xf]
  %v292 = vld [vmem:[%s283 + $0x20] sm:$0xf]
  %v293 = vld [vmem:[%s283 + $0x24] sm:$0xf]
  %v294 = vld [vmem:[%s283 + $0x28] sm:$0xf]
  %v295 = vld [vmem:[%s283 + $0x2c] sm:$0xf]
  %v296 = vld [vmem:[%s283 + $0x30] sm:$0xf]
  %v297 = vld [vmem:[%s283 + $0x34] sm:$0xf]
  %v298 = vld [vmem:[%s283 + $0x38] sm:$0xf]
  %v299 = vld [vmem:[%s283 + $0x3c] sm:$0xf]
  %v304 = vunpack.c.l.b16 %v279
  %v305 = vunpack.c.l.b16 %v280
  %v306 = vunpack.c.l.b16 %v281
  %v307 = vunpack.c.l.b16 %v282
  %v308 = vpack.c.b16 %v305, %v304
  %v309 = vpack.c.b16 %v307, %v306
  %v328 = vunpack.c.l.b16 %v284
  %v329 = vunpack.c.l.b16 %v285
  %v330 = vunpack.c.l.b16 %v286
  %v331 = vunpack.c.l.b16 %v287
  %v332 = vunpack.c.l.b16 %v288
  %v333 = vunpack.c.l.b16 %v289
  %v334 = vunpack.c.l.b16 %v290
  %v335 = vunpack.c.l.b16 %v291
  %v336 = vunpack.c.l.b16 %v292
  %v337 = vunpack.c.l.b16 %v293
  %v338 = vunpack.c.l.b16 %v294
  %v339 = vunpack.c.l.b16 %v295
  %v340 = vunpack.c.l.b16 %v296
  %v341 = vunpack.c.l.b16 %v297
  %v342 = vunpack.c.l.b16 %v298
  %v343 = vunpack.c.l.b16 %v299
  %v344 = vpack.c.b16 %v329, %v328
  %v345 = vpack.c.b16 %v331, %v330
  %v346 = vpack.c.b16 %v333, %v332
  %v347 = vpack.c.b16 %v335, %v334
  %v348 = vpack.c.b16 %v337, %v336
  %v349 = vpack.c.b16 %v339, %v338
  %v350 = vpack.c.b16 %v341, %v340
  %v351 = vpack.c.b16 %v343, %v342
  %360 = vmatprep.subr.bf16.mxu0 0
  %361 = vmatpush1.bf16.msra.mxu0 %v344
  %362 = vmatprep.subr.bf16.mxu0 0
  %363 = vmatpush1.bf16.msra.mxu0 %v345
  %364 = vmatprep.subr.bf16.mxu0 0
  %365 = vmatpush1.bf16.msra.mxu0 %v346
  %366 = vmatprep.subr.bf16.mxu0 0
  %367 = vmatpush1.bf16.msra.mxu0 %v347
  %368 = vmatprep.subr.bf16.mxu0 0
  %369 = vmatpush1.bf16.msra.mxu0 %v348
  %370 = vmatprep.subr.bf16.mxu0 0
  %371 = vmatpush1.bf16.msra.mxu0 %v349
  %372 = vmatprep.subr.bf16.mxu0 0
  %373 = vmatpush1.bf16.msra.mxu0 %v350
  %374 = vmatprep.subr.bf16.mxu0 0
  %375 = vmatpush1.bf16.msra.mxu0 %v351
  %376 = vmatprep.subr.bf16.mxu0 0
  %377 = vmatpush1.bf16.msra.mxu0 0
  %378 = vmatprep.subr.bf16.mxu0 0
  %379 = vmatpush1.bf16.msra.mxu0 0
  %380 = vmatprep.subr.bf16.mxu0 0
  %381 = vmatpush1.bf16.msra.mxu0 0
  %382 = vmatprep.subr.bf16.mxu0 0
  %383 = vmatpush1.bf16.msra.mxu0 0
  %384 = vmatprep.subr.bf16.mxu0 0
  %385 = vmatpush1.bf16.msra.mxu0 0
  %386 = vmatprep.subr.bf16.mxu0 0
  %387 = vmatpush1.bf16.msra.mxu0 0
  %388 = vmatprep.subr.bf16.mxu0 0
  %389 = vmatpush1.bf16.msra.mxu0 0
  %390 = vmatprep.subr.bf16.mxu0 0
  %391 = vmatpush1.bf16.msra.mxu0 0
  %392 = vmatprep.mubr.bf16.mxu0 0
  %393 = vmatmul.mubr.bf16.gmra.mrb[0].mxu0 %v308
  %v394 = vpop.f32.mrb[0].mxu0
  %v395 = vadd.f32 0.0, %v394
  %v396 = vpop.f32.mrb[0].mxu0
  %v397 = vpop.f32.mrb[0].mxu0
  %v398 = vadd.f32 0.0, %v397
  %v399 = vpop.f32.mrb[0].mxu0
  %400 = vmatprep.mubr.bf16.mxu0 0
  %401 = vmatmul.mubr.bf16.gmra.mrb[0].mxu0 %v309
  %v402 = vpop.f32.mrb[0].mxu0
  %v403 = vadd.f32 0.0, %v402
  %v404 = vpop.f32.mrb[0].mxu0
  %v405 = vpop.f32.mrb[0].mxu0
  %v406 = vadd.f32 0.0, %v405
  %v407 = vpop.f32.mrb[0].mxu0
  %408 = vdwg.mxu0
  %s409 = scalar_lea.vmem %s1, 48
  %v410 = vld [vmem:[%s409] sm:$0xf]
  %v411 = vld [vmem:[%s409 + $0x4] sm:$0xf]
  %v412 = vld [vmem:[%s409 + $0x8] sm:$0xf]
  %v413 = vld [vmem:[%s409 + $0xc] sm:$0xf]
  %s414 = scalar_lea.vmem %s0, 192
  %v415 = vld [vmem:[%s414] sm:$0xf]
  %v416 = vld [vmem:[%s414 + $0x4] sm:$0xf]
  %v417 = vld [vmem:[%s414 + $0x8] sm:$0xf]
  %v418 = vld [vmem:[%s414 + $0xc] sm:$0xf]
  %v419 = vld [vmem:[%s414 + $0x10] sm:$0xf]
  %v420 = vld [vmem:[%s414 + $0x14] sm:$0xf]
  %v421 = vld [vmem:[%s414 + $0x18] sm:$0xf]
  %v422 = vld [vmem:[%s414 + $0x1c] sm:$0xf]
  %v423 = vld [vmem:[%s414 + $0x20] sm:$0xf]
  %v424 = vld [vmem:[%s414 + $0x24] sm:$0xf]
  %v425 = vld [vmem:[%s414 + $0x28] sm:$0xf]
  %v426 = vld [vmem:[%s414 + $0x2c] sm:$0xf]
  %v427 = vld [vmem:[%s414 + $0x30] sm:$0xf]
  %v428 = vld [vmem:[%s414 + $0x34] sm:$0xf]
  %v429 = vld [vmem:[%s414 + $0x38] sm:$0xf]
  %v430 = vld [vmem:[%s414 + $0x3c] sm:$0xf]
  %v435 = vunpack.c.l.b16 %v410
  %v436 = vunpack.c.l.b16 %v411
  %v437 = vunpack.c.l.b16 %v412
  %v438 = vunpack.c.l.b16 %v413
  %v439 = vpack.c.b16 %v436, %v435
  %v440 = vpack.c.b16 %v438, %v437
  %v459 = vunpack.c.l.b16 %v415
  %v460 = vunpack.c.l.b16 %v416
  %v461 = vunpack.c.l.b16 %v417
  %v462 = vunpack.c.l.b16 %v418
  %v463 = vunpack.c.l.b16 %v419
  %v464 = vunpack.c.l.b16 %v420
  %v465 = vunpack.c.l.b16 %v421
  %v466 = vunpack.c.l.b16 %v422
  %v467 = vunpack.c.l.b16 %v423
  %v468 = vunpack.c.l.b16 %v424
  %v469 = vunpack.c.l.b16 %v425
  %v470 = vunpack.c.l.b16 %v426
  %v471 = vunpack.c.l.b16 %v427
  %v472 = vunpack.c.l.b16 %v428
  %v473 = vunpack.c.l.b16 %v429
  %v474 = vunpack.c.l.b16 %v430
  %v475 = vpack.c.b16 %v460, %v459
  %v476 = vpack.c.b16 %v462, %v461
  %v477 = vpack.c.b16 %v464, %v463
  %v478 = vpack.c.b16 %v466, %v465
  %v479 = vpack.c.b16 %v468, %v467
  %v480 = vpack.c.b16 %v470, %v469
  %v481 = vpack.c.b16 %v472, %v471
  %v482 = vpack.c.b16 %v474, %v473
  %491 = vmatprep.subr.bf16.mxu0 0
  %492 = vmatpush1.bf16.msra.mxu0 %v475
  %493 = vmatprep.subr.bf16.mxu0 0
  %494 = vmatpush1.bf16.msra.mxu0 %v476
  %495 = vmatprep.subr.bf16.mxu0 0
  %496 = vmatpush1.bf16.msra.mxu0 %v477
  %497 = vmatprep.subr.bf16.mxu0 0
  %498 = vmatpush1.bf16.msra.mxu0 %v478
  %499 = vmatprep.subr.bf16.mxu0 0
  %500 = vmatpush1.bf16.msra.mxu0 %v479
  %501 = vmatprep.subr.bf16.mxu0 0
  %502 = vmatpush1.bf16.msra.mxu0 %v480
  %503 = vmatprep.subr.bf16.mxu0 0
  %504 = vmatpush1.bf16.msra.mxu0 %v481
  %505 = vmatprep.subr.bf16.mxu0 0
  %506 = vmatpush1.bf16.msra.mxu0 %v482
  %507 = vmatprep.subr.bf16.mxu0 0
  %508 = vmatpush1.bf16.msra.mxu0 0
  %509 = vmatprep.subr.bf16.mxu0 0
  %510 = vmatpush1.bf16.msra.mxu0 0
  %511 = vmatprep.subr.bf16.mxu0 0
  %512 = vmatpush1.bf16.msra.mxu0 0
  %513 = vmatprep.subr.bf16.mxu0 0
  %514 = vmatpush1.bf16.msra.mxu0 0
  %515 = vmatprep.subr.bf16.mxu0 0
  %516 = vmatpush1.bf16.msra.mxu0 0
  %517 = vmatprep.subr.bf16.mxu0 0
  %518 = vmatpush1.bf16.msra.mxu0 0
  %519 = vmatprep.subr.bf16.mxu0 0
  %520 = vmatpush1.bf16.msra.mxu0 0
  %521 = vmatprep.subr.bf16.mxu0 0
  %522 = vmatpush1.bf16.msra.mxu0 0
  %523 = vmatprep.mubr.bf16.mxu0 0
  %524 = vmatmul.mubr.bf16.gmra.mrb[0].mxu0 %v439
  %v525 = vpop.f32.mrb[0].mxu0
  %v526 = vadd.f32 0.0, %v525
  %v527 = vpop.f32.mrb[0].mxu0
  %v528 = vpop.f32.mrb[0].mxu0
  %v529 = vadd.f32 0.0, %v528
  %v530 = vpop.f32.mrb[0].mxu0
  %531 = vmatprep.mubr.bf16.mxu0 0
  %532 = vmatmul.mubr.bf16.gmra.mrb[0].mxu0 %v440
  %v533 = vpop.f32.mrb[0].mxu0
  %v534 = vadd.f32 0.0, %v533
  %v535 = vpop.f32.mrb[0].mxu0
  %v536 = vpop.f32.mrb[0].mxu0
  %v537 = vadd.f32 0.0, %v536
  %v538 = vpop.f32.mrb[0].mxu0
  %539 = vdwg.mxu0
  %vm540 = vcmask 261120
  %v541 = vsel %vm540, %v133, 0.0
  %542 = vadd.xlane.f32.xlu0 %v541
  %v543 = vpop.xlane.xlu0 %542
  %v544 = vsel %vm540, %v136, 0.0
  %545 = vadd.xlane.f32.xlu0 %v544
  %v546 = vpop.xlane.xlu0 %545
  %v547 = vsel %vm540, %v141, 0.0
  %548 = vadd.xlane.f32.xlu0 %v547
  %v549 = vpop.xlane.xlu0 %548
  %v550 = vsel %vm540, %v144, 0.0
  %551 = vadd.xlane.f32.xlu0 %v550
  %v552 = vpop.xlane.xlu0 %551
  %v553 = vadd.f32 %v543, 0.0
  %v554 = vadd.f32 %v546, 0.0
  %v555 = vadd.f32 %v549, 0.0
  %v556 = vadd.f32 %v552, 0.0
  %v557 = vsel %vm540, %v264, 0.0
  %558 = vadd.xlane.f32.xlu0 %v557
  %v559 = vpop.xlane.xlu0 %558
  %v560 = vsel %vm540, %v267, 0.0
  %561 = vadd.xlane.f32.xlu0 %v560
  %v562 = vpop.xlane.xlu0 %561
  %v563 = vsel %vm540, %v272, 0.0
  %564 = vadd.xlane.f32.xlu0 %v563
  %v565 = vpop.xlane.xlu0 %564
  %v566 = vsel %vm540, %v275, 0.0
  %567 = vadd.xlane.f32.xlu0 %v566
  %v568 = vpop.xlane.xlu0 %567
  %v569 = vadd.f32 %v553, %v559
  %v570 = vadd.f32 %v554, %v562
  %v571 = vadd.f32 %v555, %v565
  %v572 = vadd.f32 %v556, %v568
  %v573 = vsel %vm540, %v395, 0.0
  %574 = vadd.xlane.f32.xlu0 %v573
  %v575 = vpop.xlane.xlu0 %574
  %v576 = vsel %vm540, %v398, 0.0
  %577 = vadd.xlane.f32.xlu0 %v576
  %v578 = vpop.xlane.xlu0 %577
  %v579 = vsel %vm540, %v403, 0.0
  %580 = vadd.xlane.f32.xlu0 %v579
  %v581 = vpop.xlane.xlu0 %580
  %v582 = vsel %vm540, %v406, 0.0
  %583 = vadd.xlane.f32.xlu0 %v582
  %v584 = vpop.xlane.xlu0 %583
  %v585 = vadd.f32 %v569, %v575
  %v586 = vadd.f32 %v570, %v578
  %v587 = vadd.f32 %v571, %v581
  %v588 = vadd.f32 %v572, %v584
  %v589 = vsel %vm540, %v526, 0.0
  %590 = vadd.xlane.f32.xlu0 %v589
  %v591 = vpop.xlane.xlu0 %590
  %v592 = vsel %vm540, %v529, 0.0
  %593 = vadd.xlane.f32.xlu0 %v592
  %v594 = vpop.xlane.xlu0 %593
  %v595 = vsel %vm540, %v534, 0.0
  %596 = vadd.xlane.f32.xlu0 %v595
  %v597 = vpop.xlane.xlu0 %596
  %v598 = vsel %vm540, %v537, 0.0
  %599 = vadd.xlane.f32.xlu0 %v598
  %v600 = vpop.xlane.xlu0 %599
  %v601 = vadd.f32 %v585, %v591
  %v602 = vadd.f32 %v586, %v594
  %v603 = vadd.f32 %v587, %v597
  %v604 = vadd.f32 %v588, %v600
  %v605 = vrcp.pop 128.0
  %v606 = vmul.f32 %v601, %v605
  %v607 = vmul.f32 %v602, %v605
  %v608 = vmul.f32 %v603, %v605
  %v609 = vmul.f32 %v604, %v605
  %v610 = vsub.f32 %v133, %v606
  %v611 = vsub.f32 %v136, %v607
  %v612 = vsub.f32 %v141, %v608
  %v613 = vsub.f32 %v144, %v609
  %v614 = vmul.f32 %v610, %v610
  %v615 = vmul.f32 %v611, %v611
  %v616 = vmul.f32 %v612, %v612
  %v617 = vmul.f32 %v613, %v613
  %v618 = vsel %vm540, %v614, 0.0
  %619 = vadd.xlane.f32.xlu0 %v618
  %v620 = vpop.xlane.xlu0 %619
  %v621 = vsel %vm540, %v615, 0.0
  %622 = vadd.xlane.f32.xlu0 %v621
  %v623 = vpop.xlane.xlu0 %622
  %v624 = vsel %vm540, %v616, 0.0
  %625 = vadd.xlane.f32.xlu0 %v624
  %v626 = vpop.xlane.xlu0 %625
  %v627 = vsel %vm540, %v617, 0.0
  %628 = vadd.xlane.f32.xlu0 %v627
  %v629 = vpop.xlane.xlu0 %628
  %v630 = vadd.f32 %v620, 0.0
  %v631 = vadd.f32 %v623, 0.0
  %v632 = vadd.f32 %v626, 0.0
  %v633 = vadd.f32 %v629, 0.0
  %v634 = vsub.f32 %v264, %v606
  %v635 = vsub.f32 %v267, %v607
  %v636 = vsub.f32 %v272, %v608
  %v637 = vsub.f32 %v275, %v609
  %v638 = vmul.f32 %v634, %v634
  %v639 = vmul.f32 %v635, %v635
  %v640 = vmul.f32 %v636, %v636
  %v641 = vmul.f32 %v637, %v637
  %v642 = vsel %vm540, %v638, 0.0
  %643 = vadd.xlane.f32.xlu0 %v642
  %v644 = vpop.xlane.xlu0 %643
  %v645 = vsel %vm540, %v639, 0.0
  %646 = vadd.xlane.f32.xlu0 %v645
  %v647 = vpop.xlane.xlu0 %646
  %v648 = vsel %vm540, %v640, 0.0
  %649 = vadd.xlane.f32.xlu0 %v648
  %v650 = vpop.xlane.xlu0 %649
  %v651 = vsel %vm540, %v641, 0.0
  %652 = vadd.xlane.f32.xlu0 %v651
  %v653 = vpop.xlane.xlu0 %652
  %v654 = vadd.f32 %v630, %v644
  %v655 = vadd.f32 %v631, %v647
  %v656 = vadd.f32 %v632, %v650
  %v657 = vadd.f32 %v633, %v653
  %v658 = vsub.f32 %v395, %v606
  %v659 = vsub.f32 %v398, %v607
  %v660 = vsub.f32 %v403, %v608
  %v661 = vsub.f32 %v406, %v609
  %v662 = vmul.f32 %v658, %v658
  %v663 = vmul.f32 %v659, %v659
  %v664 = vmul.f32 %v660, %v660
  %v665 = vmul.f32 %v661, %v661
  %v666 = vsel %vm540, %v662, 0.0
  %667 = vadd.xlane.f32.xlu0 %v666
  %v668 = vpop.xlane.xlu0 %667
  %v669 = vsel %vm540, %v663, 0.0
  %670 = vadd.xlane.f32.xlu0 %v669
  %v671 = vpop.xlane.xlu0 %670
  %v672 = vsel %vm540, %v664, 0.0
  %673 = vadd.xlane.f32.xlu0 %v672
  %v674 = vpop.xlane.xlu0 %673
  %v675 = vsel %vm540, %v665, 0.0
  %676 = vadd.xlane.f32.xlu0 %v675
  %v677 = vpop.xlane.xlu0 %676
  %v678 = vadd.f32 %v654, %v668
  %v679 = vadd.f32 %v655, %v671
  %v680 = vadd.f32 %v656, %v674
  %v681 = vadd.f32 %v657, %v677
  %v682 = vsub.f32 %v526, %v606
  %v683 = vsub.f32 %v529, %v607
  %v684 = vsub.f32 %v534, %v608
  %v685 = vsub.f32 %v537, %v609
  %v686 = vmul.f32 %v682, %v682
  %v687 = vmul.f32 %v683, %v683
  %v688 = vmul.f32 %v684, %v684
  %v689 = vmul.f32 %v685, %v685
  %v690 = vsel %vm540, %v686, 0.0
  %691 = vadd.xlane.f32.xlu0 %v690
  %v692 = vpop.xlane.xlu0 %691
  %v693 = vsel %vm540, %v687, 0.0
  %694 = vadd.xlane.f32.xlu0 %v693
  %v695 = vpop.xlane.xlu0 %694
  %v696 = vsel %vm540, %v688, 0.0
  %697 = vadd.xlane.f32.xlu0 %v696
  %v698 = vpop.xlane.xlu0 %697
  %v699 = vsel %vm540, %v689, 0.0
  %700 = vadd.xlane.f32.xlu0 %v699
  %v701 = vpop.xlane.xlu0 %700
  %v702 = vadd.f32 %v678, %v692
  %v703 = vadd.f32 %v679, %v695
  %v704 = vadd.f32 %v680, %v698
  %v705 = vadd.f32 %v681, %v701
  %v706 = vmul.f32 %v702, %v605
  %v707 = vmul.f32 %v703, %v605
  %v708 = vmul.f32 %v704, %v605
  %v709 = vmul.f32 %v705, %v605
  %v710 = vld [vmem:[%s2] sm:$0xff]
  %v711 = vld [vmem:[%s2 + $0x8] sm:$0xff]
  %v712 = vld [vmem:[%s2 + $0x10] sm:$0xff]
  %v713 = vld [vmem:[%s2 + $0x18] sm:$0xff]
  %v714 = vadd.f32 %v706, 1e-05
  %v715 = vadd.f32 %v707, 1e-05
  %v716 = vadd.f32 %v708, 1e-05
  %v717 = vadd.f32 %v709, 1e-05
  %v718 = vrsqrt.pop %v714
  %v719 = vrsqrt.pop %v715
  %v720 = vrsqrt.pop %v716
  %v721 = vrsqrt.pop %v717
  %v722 = vmul.f32 %v710, %v718
  %v723 = vmul.f32 %v711, %v719
  %v724 = vmul.f32 %v712, %v720
  %v725 = vmul.f32 %v713, %v721
  %v726 = vld [vmem:[%s3] sm:$0xff]
  %v727 = vld [vmem:[%s3 + $0x8] sm:$0xff]
  %v728 = vld [vmem:[%s3 + $0x10] sm:$0xff]
  %v729 = vld [vmem:[%s3 + $0x18] sm:$0xff]
  %v730 = vmul.f32 %v606, %v722
  %v731 = vmul.f32 %v607, %v723
  %v732 = vmul.f32 %v608, %v724
  %v733 = vmul.f32 %v609, %v725
  %v734 = vsub.f32 %v726, %v730
  %v735 = vsub.f32 %v727, %v731
  %v736 = vsub.f32 %v728, %v732
  %v737 = vsub.f32 %v729, %v733
  %739 = vset.pattern.permute.xlu0 0
  %740 = vperm.xlu0 %739, %v722
  %v741 = vpop.permute.xlu0 %740
  %744 = vset.pattern.permute.xlu0 0
  %745 = vperm.xlu0 %744, %v723
  %v746 = vpop.permute.xlu0 %745
  %749 = vset.pattern.permute.xlu0 0
  %750 = vperm.xlu0 %749, %v724
  %v751 = vpop.permute.xlu0 %750
  %754 = vset.pattern.permute.xlu0 0
  %755 = vperm.xlu0 %754, %v725
  %v756 = vpop.permute.xlu0 %755
  %v758 = vmul.f32 %v133, %v741
  %v759 = vmul.f32 %v136, %v746
  %v760 = vmul.f32 %v141, %v751
  %v761 = vmul.f32 %v144, %v756
  %763 = vset.pattern.permute.xlu0 0
  %764 = vperm.xlu0 %763, %v734
  %v765 = vpop.permute.xlu0 %764
  %768 = vset.pattern.permute.xlu0 0
  %769 = vperm.xlu0 %768, %v735
  %v770 = vpop.permute.xlu0 %769
  %773 = vset.pattern.permute.xlu0 0
  %774 = vperm.xlu0 %773, %v736
  %v775 = vpop.permute.xlu0 %774
  %778 = vset.pattern.permute.xlu0 0
  %779 = vperm.xlu0 %778, %v737
  %v780 = vpop.permute.xlu0 %779
  %v782 = vadd.f32 %v758, %v765
  %v783 = vadd.f32 %v759, %v770
  %v784 = vadd.f32 %v760, %v775
  %v785 = vadd.f32 %v761, %v780
  %vm786 = vcmp.gt.f32.partialorder %v782, 0.0
  %vm787 = vcmp.gt.f32.partialorder %v783, 0.0
  %vm788 = vcmp.gt.f32.partialorder %v784, 0.0
  %vm789 = vcmp.gt.f32.partialorder %v785, 0.0
  %v790 = vmul.f32 %v782, 1.442695
  %v791 = vpow.pop %v790
  %v792 = vmul.f32 %v783, 1.442695
  %v793 = vpow.pop %v792
  %v794 = vmul.f32 %v784, 1.442695
  %v795 = vpow.pop %v794
  %v796 = vmul.f32 %v785, 1.442695
  %v797 = vpow.pop %v796
  %v798 = vsub.f32 %v791, 1.0
  %v799 = vsub.f32 %v793, 1.0
  %v800 = vsub.f32 %v795, 1.0
  %v801 = vsub.f32 %v797, 1.0
  %v802 = vsel %vm786, %v782, %v798
  %v803 = vsel %vm787, %v783, %v799
  %v804 = vsel %vm788, %v784, %v800
  %v805 = vsel %vm789, %v785, %v801
  %v806 = vpack.c.bf16 %v803, %v802
  %v807 = vpack.c.bf16 %v805, %v804
  %v810 = vunpack.c.l.b16 %v806
  %v811 = vunpack.c.h.b16 %v806
  %v812 = vunpack.c.l.b16 %v807
  %v813 = vunpack.c.h.b16 %v807
  %v814 = vpack.c.b16 %v810, %v810
  %v815 = vpack.c.b16 %v811, %v811
  %v816 = vpack.c.b16 %v812, %v812
  %v817 = vpack.c.b16 %v813, %v813
  %vm822 = vcmask 257024
  %823 = vst.msk [vmem:[%s4] sm:$0xf] %vm822, %v814
  %824 = vst.msk [vmem:[%s4 + $0x4] sm:$0xf] %vm822, %v815
  %825 = vst.msk [vmem:[%s4 + $0x8] sm:$0xf] %vm822, %v816
  %826 = vst.msk [vmem:[%s4 + $0xc] sm:$0xf] %vm822, %v817
  %v827 = vmul.f32 %v264, %v741
  %v828 = vmul.f32 %v267, %v746
  %v829 = vmul.f32 %v272, %v751
  %v830 = vmul.f32 %v275, %v756
  %v831 = vadd.f32 %v827, %v765
  %v832 = vadd.f32 %v828, %v770
  %v833 = vadd.f32 %v829, %v775
  %v834 = vadd.f32 %v830, %v780
  %vm835 = vcmp.gt.f32.partialorder %v831, 0.0
  %vm836 = vcmp.gt.f32.partialorder %v832, 0.0
  %vm837 = vcmp.gt.f32.partialorder %v833, 0.0
  %vm838 = vcmp.gt.f32.partialorder %v834, 0.0
  %v839 = vmul.f32 %v831, 1.442695
  %v840 = vpow.pop %v839
  %v841 = vmul.f32 %v832, 1.442695
  %v842 = vpow.pop %v841
  %v843 = vmul.f32 %v833, 1.442695
  %v844 = vpow.pop %v843
  %v845 = vmul.f32 %v834, 1.442695
  %v846 = vpow.pop %v845
  %v847 = vsub.f32 %v840, 1.0
  %v848 = vsub.f32 %v842, 1.0
  %v849 = vsub.f32 %v844, 1.0
  %v850 = vsub.f32 %v846, 1.0
  %v851 = vsel %vm835, %v831, %v847
  %v852 = vsel %vm836, %v832, %v848
  %v853 = vsel %vm837, %v833, %v849
  %v854 = vsel %vm838, %v834, %v850
  %v855 = vpack.c.bf16 %v852, %v851
  %v856 = vpack.c.bf16 %v854, %v853
  %v859 = vunpack.c.l.b16 %v855
  %v860 = vunpack.c.h.b16 %v855
  %v861 = vunpack.c.l.b16 %v856
  %v862 = vunpack.c.h.b16 %v856
  %v863 = vpack.c.b16 %v859, %v859
  %v864 = vpack.c.b16 %v860, %v860
  %v865 = vpack.c.b16 %v861, %v861
  %v866 = vpack.c.b16 %v862, %v862
  %s871 = scalar_lea.vmem %s4, 16
  %872 = vst.msk [vmem:[%s871] sm:$0xf] %vm822, %v863
  %873 = vst.msk [vmem:[%s871 + $0x4] sm:$0xf] %vm822, %v864
  %874 = vst.msk [vmem:[%s871 + $0x8] sm:$0xf] %vm822, %v865
  %875 = vst.msk [vmem:[%s871 + $0xc] sm:$0xf] %vm822, %v866
  %v876 = vmul.f32 %v395, %v741
  %v877 = vmul.f32 %v398, %v746
  %v878 = vmul.f32 %v403, %v751
  %v879 = vmul.f32 %v406, %v756
  %v880 = vadd.f32 %v876, %v765
  %v881 = vadd.f32 %v877, %v770
  %v882 = vadd.f32 %v878, %v775
  %v883 = vadd.f32 %v879, %v780
  %vm884 = vcmp.gt.f32.partialorder %v880, 0.0
  %vm885 = vcmp.gt.f32.partialorder %v881, 0.0
  %vm886 = vcmp.gt.f32.partialorder %v882, 0.0
  %vm887 = vcmp.gt.f32.partialorder %v883, 0.0
  %v888 = vmul.f32 %v880, 1.442695
  %v889 = vpow.pop %v888
  %v890 = vmul.f32 %v881, 1.442695
  %v891 = vpow.pop %v890
  %v892 = vmul.f32 %v882, 1.442695
  %v893 = vpow.pop %v892
  %v894 = vmul.f32 %v883, 1.442695
  %v895 = vpow.pop %v894
  %v896 = vsub.f32 %v889, 1.0
  %v897 = vsub.f32 %v891, 1.0
  %v898 = vsub.f32 %v893, 1.0
  %v899 = vsub.f32 %v895, 1.0
  %v900 = vsel %vm884, %v880, %v896
  %v901 = vsel %vm885, %v881, %v897
  %v902 = vsel %vm886, %v882, %v898
  %v903 = vsel %vm887, %v883, %v899
  %v904 = vpack.c.bf16 %v901, %v900
  %v905 = vpack.c.bf16 %v903, %v902
  %v908 = vunpack.c.l.b16 %v904
  %v909 = vunpack.c.h.b16 %v904
  %v910 = vunpack.c.l.b16 %v905
  %v911 = vunpack.c.h.b16 %v905
  %v912 = vpack.c.b16 %v908, %v908
  %v913 = vpack.c.b16 %v909, %v909
  %v914 = vpack.c.b16 %v910, %v910
  %v915 = vpack.c.b16 %v911, %v911
  %s920 = scalar_lea.vmem %s4, 32
  %921 = vst.msk [vmem:[%s920] sm:$0xf] %vm822, %v912
  %922 = vst.msk [vmem:[%s920 + $0x4] sm:$0xf] %vm822, %v913
  %923 = vst.msk [vmem:[%s920 + $0x8] sm:$0xf] %vm822, %v914
  %924 = vst.msk [vmem:[%s920 + $0xc] sm:$0xf] %vm822, %v915
  %v925 = vmul.f32 %v526, %v741
  %v926 = vmul.f32 %v529, %v746
  %v927 = vmul.f32 %v534, %v751
  %v928 = vmul.f32 %v537, %v756
  %v929 = vadd.f32 %v925, %v765
  %v930 = vadd.f32 %v926, %v770
  %v931 = vadd.f32 %v927, %v775
  %v932 = vadd.f32 %v928, %v780
  %vm933 = vcmp.gt.f32.partialorder %v929, 0.0
  %vm934 = vcmp.gt.f32.partialorder %v930, 0.0
  %vm935 = vcmp.gt.f32.partialorder %v931, 0.0
  %vm936 = vcmp.gt.f32.partialorder %v932, 0.0
  %v937 = vmul.f32 %v929, 1.442695
  %v938 = vpow.pop %v937
  %v939 = vmul.f32 %v930, 1.442695
  %v940 = vpow.pop %v939
  %v941 = vmul.f32 %v931, 1.442695
  %v942 = vpow.pop %v941
  %v943 = vmul.f32 %v932, 1.442695
  %v944 = vpow.pop %v943
  %v945 = vsub.f32 %v938, 1.0
  %v946 = vsub.f32 %v940, 1.0
  %v947 = vsub.f32 %v942, 1.0
  %v948 = vsub.f32 %v944, 1.0
  %v949 = vsel %vm933, %v929, %v945
  %v950 = vsel %vm934, %v930, %v946
  %v951 = vsel %vm935, %v931, %v947
  %v952 = vsel %vm936, %v932, %v948
  %v953 = vpack.c.bf16 %v950, %v949
  %v954 = vpack.c.bf16 %v952, %v951
  %v957 = vunpack.c.l.b16 %v953
  %v958 = vunpack.c.h.b16 %v953
  %v959 = vunpack.c.l.b16 %v954
  %v960 = vunpack.c.h.b16 %v954
  %v961 = vpack.c.b16 %v957, %v957
  %v962 = vpack.c.b16 %v958, %v958
  %v963 = vpack.c.b16 %v959, %v959
  %v964 = vpack.c.b16 %v960, %v960
  %s969 = scalar_lea.vmem %s4, 48
  %970 = vst.msk [vmem:[%s969] sm:$0xf] %vm822, %v961
  %971 = vst.msk [vmem:[%s969 + $0x4] sm:$0xf] %vm822, %v962
  %972 = vst.msk [vmem:[%s969 + $0x8] sm:$0xf] %vm822, %v963
  %973 = vst.msk [vmem:[%s969 + $0xc] sm:$0xf] %vm822, %v964
  // Predicated region
  $region18: #{gang_forward.5} parent=0 // pred_check
    _
  $region19: #{gang_forward.5} parent=0 // pred_check_branch
    %975 = sbr.rel (0) target = $region21
  $region20: #{gang_forward.5} parent=0 // pred_region
    _
  $region21: #{gang_forward.5} parent=0 // pred_fallthru
    _
  // Predicated region
  $region22: #{gang_forward.5} parent=0 // pred_check
    _
  $region23: #{gang_forward.5} parent=0 // pred_check_branch
    %977 = sbr.rel (0) target = $region25
  $region24: #{gang_forward.5} parent=0 // pred_region
    _
  $region25: #{gang_forward.5} parent=0 // pred_fallthru
    _

// kernel: gang_forward.6
$region0: #{gang_forward.6}
  #allocation0 [shape = 'u32[]', space=smem, size = 0x4, offset = 0x4, fixed_abs, tag = 'smem constant byte address 0x4 - core index']
  #allocation1 [shape = 'u32[144,128]{1,0:T(1,128)}', space=vmem, size = 0x12000, scoped, tag = 'internal scratch']
  %s0 = inlined_call_operand.vmem [shape: bf16[4,128,128], index: 0, kind: input, shape index: {}]
  %s1 = inlined_call_operand.vmem [shape: bf16[4,16,128], index: 1, kind: input, shape index: {}]
  %s2 = inlined_call_operand.vmem [shape: f32[16,1], index: 2, kind: input, shape index: {}]
  %s3 = inlined_call_operand.vmem [shape: f32[16,1], index: 3, kind: input, shape index: {}]
  %s4 = inlined_call_operand.vmem [shape: bf16[4,16,128], index: 4, kind: output, shape index: {}]
  %s5 = sld [smem:[#allocation0]]
  $region26: #{gang_forward.6} parent=0
    _
  %s7 = ssub.s32 1, %s5
  %s8 = scalar_select 0, %s7, %s5
  // Predicated region
  $region2: #{gang_forward.6} parent=0 // pred_check
    _
  $region3: #{gang_forward.6} parent=0 // pred_check_branch
    %10 = sbr.rel (0) target = $region5
  $region4: #{gang_forward.6} parent=0 // pred_region
    _
  $region5: #{gang_forward.6} parent=0 // pred_fallthru
    _
  // Predicated region
  $region6: #{gang_forward.6} parent=0 // pred_check
    _
  $region7: #{gang_forward.6} parent=0 // pred_check_branch
    %12 = sbr.rel (0) target = $region9
  $region8: #{gang_forward.6} parent=0 // pred_region
    _
  $region9: #{gang_forward.6} parent=0 // pred_fallthru
    _
  // Predicated region
  $region10: #{gang_forward.6} parent=0 // pred_check
    _
  $region11: #{gang_forward.6} parent=0 // pred_check_branch
    %14 = sbr.rel (0) target = $region13
  $region12: #{gang_forward.6} parent=0 // pred_region
    _
  $region13: #{gang_forward.6} parent=0 // pred_fallthru
    _
  // Predicated region
  $region14: #{gang_forward.6} parent=0 // pred_check
    _
  $region15: #{gang_forward.6} parent=0 // pred_check_branch
    %16 = sbr.rel (0) target = $region17
  $region16: #{gang_forward.6} parent=0 // pred_region
    _
  $region17: #{gang_forward.6} parent=0 // pred_fallthru
    _
  %v18 = vld [vmem:[%s1] sm:$0xf]
  %v19 = vld [vmem:[%s1 + $0x4] sm:$0xf]
  %v20 = vld [vmem:[%s0] sm:$0xf]
  %v21 = vld [vmem:[%s0 + $0x4] sm:$0xf]
  %v22 = vld [vmem:[%s0 + $0x8] sm:$0xf]
  %v23 = vld [vmem:[%s0 + $0xc] sm:$0xf]
  %v24 = vld [vmem:[%s0 + $0x10] sm:$0xf]
  %v25 = vld [vmem:[%s0 + $0x14] sm:$0xf]
  %v26 = vld [vmem:[%s0 + $0x18] sm:$0xf]
  %v27 = vld [vmem:[%s0 + $0x1c] sm:$0xf]
  %v28 = vld [vmem:[%s0 + $0x20] sm:$0xf]
  %v29 = vld [vmem:[%s0 + $0x24] sm:$0xf]
  %v30 = vld [vmem:[%s0 + $0x28] sm:$0xf]
  %v31 = vld [vmem:[%s0 + $0x2c] sm:$0xf]
  %v32 = vld [vmem:[%s0 + $0x30] sm:$0xf]
  %v33 = vld [vmem:[%s0 + $0x34] sm:$0xf]
  %v34 = vld [vmem:[%s0 + $0x38] sm:$0xf]
  %v35 = vld [vmem:[%s0 + $0x3c] sm:$0xf]
  %v38 = vunpack.c.l.b16 %v18
  %v39 = vunpack.c.l.b16 %v19
  %v40 = vpack.c.b16 %v39, %v38
  %v58 = vunpack.c.l.b16 %v20
  %v59 = vunpack.c.l.b16 %v21
  %v60 = vunpack.c.l.b16 %v22
  %v61 = vunpack.c.l.b16 %v23
  %v62 = vunpack.c.l.b16 %v24
  %v63 = vunpack.c.l.b16 %v25
  %v64 = vunpack.c.l.b16 %v26
  %v65 = vunpack.c.l.b16 %v27
  %v66 = vunpack.c.l.b16 %v28
  %v67 = vunpack.c.l.b16 %v29
  %v68 = vunpack.c.l.b16 %v30
  %v69 = vunpack.c.l.b16 %v31
  %v70 = vunpack.c.l.b16 %v32
  %v71 = vunpack.c.l.b16 %v33
  %v72 = vunpack.c.l.b16 %v34
  %v73 = vunpack.c.l.b16 %v35
  %v74 = vpack.c.b16 %v59, %v58
  %v75 = vpack.c.b16 %v61, %v60
  %v76 = vpack.c.b16 %v63, %v62
  %v77 = vpack.c.b16 %v65, %v64
  %v78 = vpack.c.b16 %v67, %v66
  %v79 = vpack.c.b16 %v69, %v68
  %v80 = vpack.c.b16 %v71, %v70
  %v81 = vpack.c.b16 %v73, %v72
  %90 = vmatprep.subr.bf16.mxu0 0
  %91 = vmatpush1.bf16.msra.mxu0 %v74
  %92 = vmatprep.subr.bf16.mxu0 0
  %93 = vmatpush1.bf16.msra.mxu0 %v75
  %94 = vmatprep.subr.bf16.mxu0 0
  %95 = vmatpush1.bf16.msra.mxu0 %v76
  %96 = vmatprep.subr.bf16.mxu0 0
  %97 = vmatpush1.bf16.msra.mxu0 %v77
  %98 = vmatprep.subr.bf16.mxu0 0
  %99 = vmatpush1.bf16.msra.mxu0 %v78
  %100 = vmatprep.subr.bf16.mxu0 0
  %101 = vmatpush1.bf16.msra.mxu0 %v79
  %102 = vmatprep.subr.bf16.mxu0 0
  %103 = vmatpush1.bf16.msra.mxu0 %v80
  %104 = vmatprep.subr.bf16.mxu0 0
  %105 = vmatpush1.bf16.msra.mxu0 %v81
  %106 = vmatprep.subr.bf16.mxu0 0
  %107 = vmatpush1.bf16.msra.mxu0 0
  %108 = vmatprep.subr.bf16.mxu0 0
  %109 = vmatpush1.bf16.msra.mxu0 0
  %110 = vmatprep.subr.bf16.mxu0 0
  %111 = vmatpush1.bf16.msra.mxu0 0
  %112 = vmatprep.subr.bf16.mxu0 0
  %113 = vmatpush1.bf16.msra.mxu0 0
  %114 = vmatprep.subr.bf16.mxu0 0
  %115 = vmatpush1.bf16.msra.mxu0 0
  %116 = vmatprep.subr.bf16.mxu0 0
  %117 = vmatpush1.bf16.msra.mxu0 0
  %118 = vmatprep.subr.bf16.mxu0 0
  %119 = vmatpush1.bf16.msra.mxu0 0
  %120 = vmatprep.subr.bf16.mxu0 0
  %121 = vmatpush1.bf16.msra.mxu0 0
  %122 = vmatprep.mubr.bf16.mxu0 0
  %123 = vmatmul.mubr.bf16.gmra.mrb[0].mxu0 %v40
  %v124 = vpop.f32.mrb[0].mxu0
  %v125 = vadd.f32 0.0, %v124
  %v126 = vpop.f32.mrb[0].mxu0
  %v127 = vpop.f32.mrb[0].mxu0
  %v128 = vadd.f32 0.0, %v127
  %v129 = vpop.f32.mrb[0].mxu0
  %130 = vdwg.mxu0
  %s131 = scalar_lea.vmem %s1, 8
  %v132 = vld [vmem:[%s131] sm:$0xf]
  %v133 = vld [vmem:[%s131 + $0x4] sm:$0xf]
  %s134 = scalar_lea.vmem %s0, 64
  %v135 = vld [vmem:[%s134] sm:$0xf]
  %v136 = vld [vmem:[%s134 + $0x4] sm:$0xf]
  %v137 = vld [vmem:[%s134 + $0x8] sm:$0xf]
  %v138 = vld [vmem:[%s134 + $0xc] sm:$0xf]
  %v139 = vld [vmem:[%s134 + $0x10] sm:$0xf]
  %v140 = vld [vmem:[%s134 + $0x14] sm:$0xf]
  %v141 = vld [vmem:[%s134 + $0x18] sm:$0xf]
  %v142 = vld [vmem:[%s134 + $0x1c] sm:$0xf]
  %v143 = vld [vmem:[%s134 + $0x20] sm:$0xf]
  %v144 = vld [vmem:[%s134 + $0x24] sm:$0xf]
  %v145 = vld [vmem:[%s134 + $0x28] sm:$0xf]
  %v146 = vld [vmem:[%s134 + $0x2c] sm:$0xf]
  %v147 = vld [vmem:[%s134 + $0x30] sm:$0xf]
  %v148 = vld [vmem:[%s134 + $0x34] sm:$0xf]
  %v149 = vld [vmem:[%s134 + $0x38] sm:$0xf]
  %v150 = vld [vmem:[%s134 + $0x3c] sm:$0xf]
  %v153 = vunpack.c.l.b16 %v132
  %v154 = vunpack.c.l.b16 %v133
  %v155 = vpack.c.b16 %v154, %v153
  %v173 = vunpack.c.l.b16 %v135
  %v174 = vunpack.c.l.b16 %v136
  %v175 = vunpack.c.l.b16 %v137
  %v176 = vunpack.c.l.b16 %v138
  %v177 = vunpack.c.l.b16 %v139
  %v178 = vunpack.c.l.b16 %v140
  %v179 = vunpack.c.l.b16 %v141
  %v180 = vunpack.c.l.b16 %v142
  %v181 = vunpack.c.l.b16 %v143
  %v182 = vunpack.c.l.b16 %v144
  %v183 = vunpack.c.l.b16 %v145
  %v184 = vunpack.c.l.b16 %v146
  %v185 = vunpack.c.l.b16 %v147
  %v186 = vunpack.c.l.b16 %v148
  %v187 = vunpack.c.l.b16 %v149
  %v188 = vunpack.c.l.b16 %v150
  %v189 = vpack.c.b16 %v174, %v173
  %v190 = vpack.c.b16 %v176, %v175
  %v191 = vpack.c.b16 %v178, %v177
  %v192 = vpack.c.b16 %v180, %v179
  %v193 = vpack.c.b16 %v182, %v181
  %v194 = vpack.c.b16 %v184, %v183
  %v195 = vpack.c.b16 %v186, %v185
  %v196 = vpack.c.b16 %v188, %v187
  %205 = vmatprep.subr.bf16.mxu0 0
  %206 = vmatpush1.bf16.msra.mxu0 %v189
  %207 = vmatprep.subr.bf16.mxu0 0
  %208 = vmatpush1.bf16.msra.mxu0 %v190
  %209 = vmatprep.subr.bf16.mxu0 0
  %210 = vmatpush1.bf16.msra.mxu0 %v191
  %211 = vmatprep.subr.bf16.mxu0 0
  %212 = vmatpush1.bf16.msra.mxu0 %v192
  %213 = vmatprep.subr.bf16.mxu0 0
  %214 = vmatpush1.bf16.msra.mxu0 %v193
  %215 = vmatprep.subr.bf16.mxu0 0
  %216 = vmatpush1.bf16.msra.mxu0 %v194
  %217 = vmatprep.subr.bf16.mxu0 0
  %218 = vmatpush1.bf16.msra.mxu0 %v195
  %219 = vmatprep.subr.bf16.mxu0 0
  %220 = vmatpush1.bf16.msra.mxu0 %v196
  %221 = vmatprep.subr.bf16.mxu0 0
  %222 = vmatpush1.bf16.msra.mxu0 0
  %223 = vmatprep.subr.bf16.mxu0 0
  %224 = vmatpush1.bf16.msra.mxu0 0
  %225 = vmatprep.subr.bf16.mxu0 0
  %226 = vmatpush1.bf16.msra.mxu0 0
  %227 = vmatprep.subr.bf16.mxu0 0
  %228 = vmatpush1.bf16.msra.mxu0 0
  %229 = vmatprep.subr.bf16.mxu0 0
  %230 = vmatpush1.bf16.msra.mxu0 0
  %231 = vmatprep.subr.bf16.mxu0 0
  %232 = vmatpush1.bf16.msra.mxu0 0
  %233 = vmatprep.subr.bf16.mxu0 0
  %234 = vmatpush1.bf16.msra.mxu0 0
  %235 = vmatprep.subr.bf16.mxu0 0
  %236 = vmatpush1.bf16.msra.mxu0 0
  %237 = vmatprep.mubr.bf16.mxu0 0
  %238 = vmatmul.mubr.bf16.gmra.mrb[0].mxu0 %v155
  %v239 = vpop.f32.mrb[0].mxu0
  %v240 = vadd.f32 0.0, %v239
  %v241 = vpop.f32.mrb[0].mxu0
  %v242 = vpop.f32.mrb[0].mxu0
  %v243 = vadd.f32 0.0, %v242
  %v244 = vpop.f32.mrb[0].mxu0
  %245 = vdwg.mxu0
  %s246 = scalar_lea.vmem %s1, 16
  %v247 = vld [vmem:[%s246] sm:$0xf]
  %v248 = vld [vmem:[%s246 + $0x4] sm:$0xf]
  %s249 = scalar_lea.vmem %s0, 128
  %v250 = vld [vmem:[%s249] sm:$0xf]
  %v251 = vld [vmem:[%s249 + $0x4] sm:$0xf]
  %v252 = vld [vmem:[%s249 + $0x8] sm:$0xf]
  %v253 = vld [vmem:[%s249 + $0xc] sm:$0xf]
  %v254 = vld [vmem:[%s249 + $0x10] sm:$0xf]
  %v255 = vld [vmem:[%s249 + $0x14] sm:$0xf]
  %v256 = vld [vmem:[%s249 + $0x18] sm:$0xf]
  %v257 = vld [vmem:[%s249 + $0x1c] sm:$0xf]
  %v258 = vld [vmem:[%s249 + $0x20] sm:$0xf]
  %v259 = vld [vmem:[%s249 + $0x24] sm:$0xf]
  %v260 = vld [vmem:[%s249 + $0x28] sm:$0xf]
  %v261 = vld [vmem:[%s249 + $0x2c] sm:$0xf]
  %v262 = vld [vmem:[%s249 + $0x30] sm:$0xf]
  %v263 = vld [vmem:[%s249 + $0x34] sm:$0xf]
  %v264 = vld [vmem:[%s249 + $0x38] sm:$0xf]
  %v265 = vld [vmem:[%s249 + $0x3c] sm:$0xf]
  %v268 = vunpack.c.l.b16 %v247
  %v269 = vunpack.c.l.b16 %v248
  %v270 = vpack.c.b16 %v269, %v268
  %v288 = vunpack.c.l.b16 %v250
  %v289 = vunpack.c.l.b16 %v251
  %v290 = vunpack.c.l.b16 %v252
  %v291 = vunpack.c.l.b16 %v253
  %v292 = vunpack.c.l.b16 %v254
  %v293 = vunpack.c.l.b16 %v255
  %v294 = vunpack.c.l.b16 %v256
  %v295 = vunpack.c.l.b16 %v257
  %v296 = vunpack.c.l.b16 %v258
  %v297 = vunpack.c.l.b16 %v259
  %v298 = vunpack.c.l.b16 %v260
  %v299 = vunpack.c.l.b16 %v261
  %v300 = vunpack.c.l.b16 %v262
  %v301 = vunpack.c.l.b16 %v263
  %v302 = vunpack.c.l.b16 %v264
  %v303 = vunpack.c.l.b16 %v265
  %v304 = vpack.c.b16 %v289, %v288
  %v305 = vpack.c.b16 %v291, %v290
  %v306 = vpack.c.b16 %v293, %v292
  %v307 = vpack.c.b16 %v295, %v294
  %v308 = vpack.c.b16 %v297, %v296
  %v309 = vpack.c.b16 %v299, %v298
  %v310 = vpack.c.b16 %v301, %v300
  %v311 = vpack.c.b16 %v303, %v302
  %320 = vmatprep.subr.bf16.mxu0 0
  %321 = vmatpush1.bf16.msra.mxu0 %v304
  %322 = vmatprep.subr.bf16.mxu0 0
  %323 = vmatpush1.bf16.msra.mxu0 %v305
  %324 = vmatprep.subr.bf16.mxu0 0
  %325 = vmatpush1.bf16.msra.mxu0 %v306
  %326 = vmatprep.subr.bf16.mxu0 0
  %327 = vmatpush1.bf16.msra.mxu0 %v307
  %328 = vmatprep.subr.bf16.mxu0 0
  %329 = vmatpush1.bf16.msra.mxu0 %v308
  %330 = vmatprep.subr.bf16.mxu0 0
  %331 = vmatpush1.bf16.msra.mxu0 %v309
  %332 = vmatprep.subr.bf16.mxu0 0
  %333 = vmatpush1.bf16.msra.mxu0 %v310
  %334 = vmatprep.subr.bf16.mxu0 0
  %335 = vmatpush1.bf16.msra.mxu0 %v311
  %336 = vmatprep.subr.bf16.mxu0 0
  %337 = vmatpush1.bf16.msra.mxu0 0
  %338 = vmatprep.subr.bf16.mxu0 0
  %339 = vmatpush1.bf16.msra.mxu0 0
  %340 = vmatprep.subr.bf16.mxu0 0
  %341 = vmatpush1.bf16.msra.mxu0 0
  %342 = vmatprep.subr.bf16.mxu0 0
  %343 = vmatpush1.bf16.msra.mxu0 0
  %344 = vmatprep.subr.bf16.mxu0 0
  %345 = vmatpush1.bf16.msra.mxu0 0
  %346 = vmatprep.subr.bf16.mxu0 0
  %347 = vmatpush1.bf16.msra.mxu0 0
  %348 = vmatprep.subr.bf16.mxu0 0
  %349 = vmatpush1.bf16.msra.mxu0 0
  %350 = vmatprep.subr.bf16.mxu0 0
  %351 = vmatpush1.bf16.msra.mxu0 0
  %352 = vmatprep.mubr.bf16.mxu0 0
  %353 = vmatmul.mubr.bf16.gmra.mrb[0].mxu0 %v270
  %v354 = vpop.f32.mrb[0].mxu0
  %v355 = vadd.f32 0.0, %v354
  %v356 = vpop.f32.mrb[0].mxu0
  %v357 = vpop.f32.mrb[0].mxu0
  %v358 = vadd.f32 0.0, %v357
  %v359 = vpop.f32.mrb[0].mxu0
  %360 = vdwg.mxu0
  %s361 = scalar_lea.vmem %s1, 24
  %v362 = vld [vmem:[%s361] sm:$0xf]
  %v363 = vld [vmem:[%s361 + $0x4] sm:$0xf]
  %s364 = scalar_lea.vmem %s0, 192
  %v365 = vld [vmem:[%s364] sm:$0xf]
  %v366 = vld [vmem:[%s364 + $0x4] sm:$0xf]
  %v367 = vld [vmem:[%s364 + $0x8] sm:$0xf]
  %v368 = vld [vmem:[%s364 + $0xc] sm:$0xf]
  %v369 = vld [vmem:[%s364 + $0x10] sm:$0xf]
  %v370 = vld [vmem:[%s364 + $0x14] sm:$0xf]
  %v371 = vld [vmem:[%s364 + $0x18] sm:$0xf]
  %v372 = vld [vmem:[%s364 + $0x1c] sm:$0xf]
  %v373 = vld [vmem:[%s364 + $0x20] sm:$0xf]
  %v374 = vld [vmem:[%s364 + $0x24] sm:$0xf]
  %v375 = vld [vmem:[%s364 + $0x28] sm:$0xf]
  %v376 = vld [vmem:[%s364 + $0x2c] sm:$0xf]
  %v377 = vld [vmem:[%s364 + $0x30] sm:$0xf]
  %v378 = vld [vmem:[%s364 + $0x34] sm:$0xf]
  %v379 = vld [vmem:[%s364 + $0x38] sm:$0xf]
  %v380 = vld [vmem:[%s364 + $0x3c] sm:$0xf]
  %v383 = vunpack.c.l.b16 %v362
  %v384 = vunpack.c.l.b16 %v363
  %v385 = vpack.c.b16 %v384, %v383
  %v403 = vunpack.c.l.b16 %v365
  %v404 = vunpack.c.l.b16 %v366
  %v405 = vunpack.c.l.b16 %v367
  %v406 = vunpack.c.l.b16 %v368
  %v407 = vunpack.c.l.b16 %v369
  %v408 = vunpack.c.l.b16 %v370
  %v409 = vunpack.c.l.b16 %v371
  %v410 = vunpack.c.l.b16 %v372
  %v411 = vunpack.c.l.b16 %v373
  %v412 = vunpack.c.l.b16 %v374
  %v413 = vunpack.c.l.b16 %v375
  %v414 = vunpack.c.l.b16 %v376
  %v415 = vunpack.c.l.b16 %v377
  %v416 = vunpack.c.l.b16 %v378
  %v417 = vunpack.c.l.b16 %v379
  %v418 = vunpack.c.l.b16 %v380
  %v419 = vpack.c.b16 %v404, %v403
  %v420 = vpack.c.b16 %v406, %v405
  %v421 = vpack.c.b16 %v408, %v407
  %v422 = vpack.c.b16 %v410, %v409
  %v423 = vpack.c.b16 %v412, %v411
  %v424 = vpack.c.b16 %v414, %v413
  %v425 = vpack.c.b16 %v416, %v415
  %v426 = vpack.c.b16 %v418, %v417
  %435 = vmatprep.subr.bf16.mxu0 0
  %436 = vmatpush1.bf16.msra.mxu0 %v419
  %437 = vmatprep.subr.bf16.mxu0 0
  %438 = vmatpush1.bf16.msra.mxu0 %v420
  %439 = vmatprep.subr.bf16.mxu0 0
  %440 = vmatpush1.bf16.msra.mxu0 %v421
  %441 = vmatprep.subr.bf16.mxu0 0
  %442 = vmatpush1.bf16.msra.mxu0 %v422
  %443 = vmatprep.subr.bf16.mxu0 0
  %444 = vmatpush1.bf16.msra.mxu0 %v423
  %445 = vmatprep.subr.bf16.mxu0 0
  %446 = vmatpush1.bf16.msra.mxu0 %v424
  %447 = vmatprep.subr.bf16.mxu0 0
  %448 = vmatpush1.bf16.msra.mxu0 %v425
  %449 = vmatprep.subr.bf16.mxu0 0
  %450 = vmatpush1.bf16.msra.mxu0 %v426
  %451 = vmatprep.subr.bf16.mxu0 0
  %452 = vmatpush1.bf16.msra.mxu0 0
  %453 = vmatprep.subr.bf16.mxu0 0
  %454 = vmatpush1.bf16.msra.mxu0 0
  %455 = vmatprep.subr.bf16.mxu0 0
  %456 = vmatpush1.bf16.msra.mxu0 0
  %457 = vmatprep.subr.bf16.mxu0 0
  %458 = vmatpush1.bf16.msra.mxu0 0
  %459 = vmatprep.subr.bf16.mxu0 0
  %460 = vmatpush1.bf16.msra.mxu0 0
  %461 = vmatprep.subr.bf16.mxu0 0
  %462 = vmatpush1.bf16.msra.mxu0 0
  %463 = vmatprep.subr.bf16.mxu0 0
  %464 = vmatpush1.bf16.msra.mxu0 0
  %465 = vmatprep.subr.bf16.mxu0 0
  %466 = vmatpush1.bf16.msra.mxu0 0
  %467 = vmatprep.mubr.bf16.mxu0 0
  %468 = vmatmul.mubr.bf16.gmra.mrb[0].mxu0 %v385
  %v469 = vpop.f32.mrb[0].mxu0
  %v470 = vadd.f32 0.0, %v469
  %v471 = vpop.f32.mrb[0].mxu0
  %v472 = vpop.f32.mrb[0].mxu0
  %v473 = vadd.f32 0.0, %v472
  %v474 = vpop.f32.mrb[0].mxu0
  %475 = vdwg.mxu0
  %476 = vadd.xlane.f32.xlu0 %v125
  %v477 = vpop.xlane.xlu0 %476
  %478 = vadd.xlane.f32.xlu0 %v128
  %v479 = vpop.xlane.xlu0 %478
  %v480 = vadd.f32 %v477, 0.0
  %v481 = vadd.f32 %v479, 0.0
  %482 = vadd.xlane.f32.xlu0 %v240
  %v483 = vpop.xlane.xlu0 %482
  %484 = vadd.xlane.f32.xlu0 %v243
  %v485 = vpop.xlane.xlu0 %484
  %v486 = vadd.f32 %v480, %v483
  %v487 = vadd.f32 %v481, %v485
  %488 = vadd.xlane.f32.xlu0 %v355
  %v489 = vpop.xlane.xlu0 %488
  %490 = vadd.xlane.f32.xlu0 %v358
  %v491 = vpop.xlane.xlu0 %490
  %v492 = vadd.f32 %v486, %v489
  %v493 = vadd.f32 %v487, %v491
  %494 = vadd.xlane.f32.xlu0 %v470
  %v495 = vpop.xlane.xlu0 %494
  %496 = vadd.xlane.f32.xlu0 %v473
  %v497 = vpop.xlane.xlu0 %496
  %v498 = vadd.f32 %v492, %v495
  %v499 = vadd.f32 %v493, %v497
  %v500 = vrcp.pop 512.0
  %v501 = vmul.f32 %v498, %v500
  %v502 = vmul.f32 %v499, %v500
  %v503 = vsub.f32 %v125, %v501
  %v504 = vsub.f32 %v128, %v502
  %v505 = vmul.f32 %v503, %v503
  %v506 = vmul.f32 %v504, %v504
  %507 = vadd.xlane.f32.xlu0 %v505
  %v508 = vpop.xlane.xlu0 %507
  %509 = vadd.xlane.f32.xlu0 %v506
  %v510 = vpop.xlane.xlu0 %509
  %v511 = vadd.f32 %v508, 0.0
  %v512 = vadd.f32 %v510, 0.0
  %v513 = vsub.f32 %v240, %v501
  %v514 = vsub.f32 %v243, %v502
  %v515 = vmul.f32 %v513, %v513
  %v516 = vmul.f32 %v514, %v514
  %517 = vadd.xlane.f32.xlu0 %v515
  %v518 = vpop.xlane.xlu0 %517
  %519 = vadd.xlane.f32.xlu0 %v516
  %v520 = vpop.xlane.xlu0 %519
  %v521 = vadd.f32 %v511, %v518
  %v522 = vadd.f32 %v512, %v520
  %v523 = vsub.f32 %v355, %v501
  %v524 = vsub.f32 %v358, %v502
  %v525 = vmul.f32 %v523, %v523
  %v526 = vmul.f32 %v524, %v524
  %527 = vadd.xlane.f32.xlu0 %v525
  %v528 = vpop.xlane.xlu0 %527
  %529 = vadd.xlane.f32.xlu0 %v526
  %v530 = vpop.xlane.xlu0 %529
  %v531 = vadd.f32 %v521, %v528
  %v532 = vadd.f32 %v522, %v530
  %v533 = vsub.f32 %v470, %v501
  %v534 = vsub.f32 %v473, %v502
  %v535 = vmul.f32 %v533, %v533
  %v536 = vmul.f32 %v534, %v534
  %537 = vadd.xlane.f32.xlu0 %v535
  %v538 = vpop.xlane.xlu0 %537
  %539 = vadd.xlane.f32.xlu0 %v536
  %v540 = vpop.xlane.xlu0 %539
  %v541 = vadd.f32 %v531, %v538
  %v542 = vadd.f32 %v532, %v540
  %v543 = vmul.f32 %v541, %v500
  %v544 = vmul.f32 %v542, %v500
  %v545 = vld [vmem:[%s2] sm:$0xff]
  %v546 = vld [vmem:[%s2 + $0x8] sm:$0xff]
  %v547 = vadd.f32 %v543, 1e-05
  %v548 = vadd.f32 %v544, 1e-05
  %v549 = vrsqrt.pop %v547
  %v550 = vrsqrt.pop %v548
  %v551 = vmul.f32 %v545, %v549
  %v552 = vmul.f32 %v546, %v550
  %v553 = vld [vmem:[%s3] sm:$0xff]
  %v554 = vld [vmem:[%s3 + $0x8] sm:$0xff]
  %v555 = vmul.f32 %v501, %v551
  %v556 = vmul.f32 %v502, %v552
  %v557 = vsub.f32 %v553, %v555
  %v558 = vsub.f32 %v554, %v556
  %560 = vset.pattern.permute.xlu0 0
  %561 = vperm.xlu0 %560, %v551
  %v562 = vpop.permute.xlu0 %561
  %565 = vset.pattern.permute.xlu0 0
  %566 = vperm.xlu0 %565, %v552
  %v567 = vpop.permute.xlu0 %566
  %v569 = vmul.f32 %v125, %v562
  %v570 = vmul.f32 %v128, %v567
  %572 = vset.pattern.permute.xlu0 0
  %573 = vperm.xlu0 %572, %v557
  %v574 = vpop.permute.xlu0 %573
  %577 = vset.pattern.permute.xlu0 0
  %578 = vperm.xlu0 %577, %v558
  %v579 = vpop.permute.xlu0 %578
  %v581 = vadd.f32 %v569, %v574
  %v582 = vadd.f32 %v570, %v579
  %vm583 = vcmp.gt.f32.partialorder %v581, 0.0
  %vm584 = vcmp.gt.f32.partialorder %v582, 0.0
  %v585 = vmul.f32 %v581, 1.442695
  %v586 = vpow.pop %v585
  %v587 = vmul.f32 %v582, 1.442695
  %v588 = vpow.pop %v587
  %v589 = vsub.f32 %v586, 1.0
  %v590 = vsub.f32 %v588, 1.0
  %v591 = vsel %vm583, %v581, %v589
  %v592 = vsel %vm584, %v582, %v590
  %v593 = vpack.c.bf16 %v592, %v591
  %v595 = vunpack.c.l.b16 %v593
  %v596 = vunpack.c.h.b16 %v593
  %v597 = vpack.c.b16 %v595, %v595
  %v598 = vpack.c.b16 %v596, %v596
  %601 = vst [vmem:[%s4] sm:$0xf] %v597
  %602 = vst [vmem:[%s4 + $0x4] sm:$0xf] %v598
  %v603 = vmul.f32 %v240, %v562
  %v604 = vmul.f32 %v243, %v567
  %v605 = vadd.f32 %v603, %v574
  %v606 = vadd.f32 %v604, %v579
  %vm607 = vcmp.gt.f32.partialorder %v605, 0.0
  %vm608 = vcmp.gt.f32.partialorder %v606, 0.0
  %v609 = vmul.f32 %v605, 1.442695
  %v610 = vpow.pop %v609
  %v611 = vmul.f32 %v606, 1.442695
  %v612 = vpow.pop %v611
  %v613 = vsub.f32 %v610, 1.0
  %v614 = vsub.f32 %v612, 1.0
  %v615 = vsel %vm607, %v605, %v613
  %v616 = vsel %vm608, %v606, %v614
  %v617 = vpack.c.bf16 %v616, %v615
  %v619 = vunpack.c.l.b16 %v617
  %v620 = vunpack.c.h.b16 %v617
  %v621 = vpack.c.b16 %v619, %v619
  %v622 = vpack.c.b16 %v620, %v620
  %s625 = scalar_lea.vmem %s4, 8
  %626 = vst [vmem:[%s625] sm:$0xf] %v621
  %627 = vst [vmem:[%s625 + $0x4] sm:$0xf] %v622
  %v628 = vmul.f32 %v355, %v562
  %v629 = vmul.f32 %v358, %v567
  %v630 = vadd.f32 %v628, %v574
  %v631 = vadd.f32 %v629, %v579
  %vm632 = vcmp.gt.f32.partialorder %v630, 0.0
  %vm633 = vcmp.gt.f32.partialorder %v631, 0.0
  %v634 = vmul.f32 %v630, 1.442695
  %v635 = vpow.pop %v634
  %v636 = vmul.f32 %v631, 1.442695
  %v637 = vpow.pop %v636
  %v638 = vsub.f32 %v635, 1.0
  %v639 = vsub.f32 %v637, 1.0
  %v640 = vsel %vm632, %v630, %v638
  %v641 = vsel %vm633, %v631, %v639
  %v642 = vpack.c.bf16 %v641, %v640
  %v644 = vunpack.c.l.b16 %v642
  %v645 = vunpack.c.h.b16 %v642
  %v646 = vpack.c.b16 %v644, %v644
  %v647 = vpack.c.b16 %v645, %v645
  %s650 = scalar_lea.vmem %s4, 16
  %651 = vst [vmem:[%s650] sm:$0xf] %v646
  %652 = vst [vmem:[%s650 + $0x4] sm:$0xf] %v647
  %v653 = vmul.f32 %v470, %v562
  %v654 = vmul.f32 %v473, %v567
  %v655 = vadd.f32 %v653, %v574
  %v656 = vadd.f32 %v654, %v579
  %vm657 = vcmp.gt.f32.partialorder %v655, 0.0
  %vm658 = vcmp.gt.f32.partialorder %v656, 0.0
  %v659 = vmul.f32 %v655, 1.442695
  %v660 = vpow.pop %v659
  %v661 = vmul.f32 %v656, 1.442695
  %v662 = vpow.pop %v661
  %v663 = vsub.f32 %v660, 1.0
  %v664 = vsub.f32 %v662, 1.0
  %v665 = vsel %vm657, %v655, %v663
  %v666 = vsel %vm658, %v656, %v664
  %v667 = vpack.c.bf16 %v666, %v665
  %v669 = vunpack.c.l.b16 %v667
  %v670 = vunpack.c.h.b16 %v667
  %v671 = vpack.c.b16 %v669, %v669
  %v672 = vpack.c.b16 %v670, %v670
  %s675 = scalar_lea.vmem %s4, 24
  %676 = vst [vmem:[%s675] sm:$0xf] %v671
  %677 = vst [vmem:[%s675 + $0x4] sm:$0xf] %v672
  // Predicated region
  $region18: #{gang_forward.6} parent=0 // pred_check
    _
  $region19: #{gang_forward.6} parent=0 // pred_check_branch
    %679 = sbr.rel (0) target = $region21
  $region20: #{gang_forward.6} parent=0 // pred_region
    _
  $region21: #{gang_forward.6} parent=0 // pred_fallthru
    _
  // Predicated region
  $region22: #{gang_forward.6} parent=0 // pred_check
    _
  $region23: #{gang_forward.6} parent=0 // pred_check_branch
    %681 = sbr.rel (0) target = $region25
  $region24: #{gang_forward.6} parent=0 // pred_region
    _
  $region25: #{gang_forward.6} parent=0 // pred_fallthru
    _

// kernel: gang_forward.7
$region0: #{gang_forward.7}
  #allocation0 [shape = 'u32[]', space=smem, size = 0x4, offset = 0x4, fixed_abs, tag = 'smem constant byte address 0x4 - core index']
  #allocation1 [shape = 'u32[144,128]{1,0:T(1,128)}', space=vmem, size = 0x12000, scoped, tag = 'internal scratch']
  %s0 = inlined_call_operand.vmem [shape: bf16[4,64,512], index: 0, kind: input, shape index: {}]
  %s1 = inlined_call_operand.vmem [shape: bf16[4,3,64], index: 1, kind: input, shape index: {}]
  %s2 = inlined_call_operand.vmem [shape: f32[4,3,512], index: 2, kind: output, shape index: {}]
  %s3 = sld [smem:[#allocation0]]
  $region41: #{gang_forward.7} parent=0
    _
  %s5 = ssub.s32 1, %s3
  %s6 = scalar_select 0, %s5, %s3
  loop: start=0, step=1, limit=6
  $region2: #{gang_forward.7} parent=0 // loop_pre_header
    _
  $region3: #{gang_forward.7} parent=0 // loop_header
    %s8 = sphi 0, %s12
    %p9 = scmp.ge.s32.totalorder %s8, 6
    %s18 = sphi 0, %s20
    %s21 = sphi 0, %s18
    %s22 = sphi 0, %s21
    %s38 = sphi 0, %s22
    %s44 = sphi 0, %s46
    %s47 = sphi 0, %s44
    %s48 = sphi 0, %s47
    %s64 = sphi 0, %s48
    %s70 = sphi 0, %s72
    %s73 = sphi 0, %s70
    %s74 = sphi 0, %s73
    %s90 = sphi 0, %s74
  $region4: #{gang_forward.7} parent=0 // loop_header_branch
    %11 = sbr.rel (%p9) target = $region8
  $region5: #{gang_forward.7} parent=0 // loop_body
    %s13 = ssub.s32 %s8, 1
    %s14 = ssub.s32 %s8, 2
    %s15 = sadd.s32 %s8, 1
    %s16 = ssub.s32 %s8, %s15
    %p17 = scmp.eq.s32.totalorder %s16, 0
    %s19 = sadd.s32 %s18, 1
    %s20 = scalar_select %p17, %s18, %s19
    %p23 = pneg %p17
    %p24 = scmp.eq.s32.totalorder %s8, 3
    %p25 = por %p23, %p24
    %p26 = scmp.ne.s32.totalorder %s18, %s21
    %p27 = scmp.eq.s32.totalorder %s8, 0
    %p28 = por %p26, %p27
    %p29 = scmp.ne.s32.totalorder %s18, %s21
    %p30 = scmp.eq.s32.totalorder %s13, 3
    %p31 = por %p29, %p30
    %p32 = scmp.ne.s32.totalorder %s21, %s22
    %p33 = scmp.eq.s32.totalorder %s13, 0
    %p34 = por %p32, %p33
    %p35 = scmp.ne.s32.totalorder %s21, %s22
    %p36 = scmp.eq.s32.totalorder %s14, 3
    %p37 = por %p35, %p36
    %p39 = scmp.ne.s32.totalorder %s22, %s38
    %p40 = scmp.eq.s32.totalorder %s14, 0
    %p41 = por %p39, %p40
    %s42 = ssub.s32 %s8, %s15
    %p43 = scmp.eq.s32.totalorder %s42, 0
    %s45 = sadd.s32 %s44, 1
    %s46 = scalar_select %p43, %s44, %s45
    %p49 = pneg %p43
    %p50 = scmp.eq.s32.totalorder %s8, 3
    %p51 = por %p49, %p50
    %p52 = scmp.ne.s32.totalorder %s44, %s47
    %p53 = scmp.eq.s32.totalorder %s8, 0
    %p54 = por %p52, %p53
    %p55 = scmp.ne.s32.totalorder %s44, %s47
    %p56 = scmp.eq.s32.totalorder %s13, 3
    %p57 = por %p55, %p56
    %p58 = scmp.ne.s32.totalorder %s47, %s48
    %p59 = scmp.eq.s32.totalorder %s13, 0
    %p60 = por %p58, %p59
    %p61 = scmp.ne.s32.totalorder %s47, %s48
    %p62 = scmp.eq.s32.totalorder %s14, 3
    %p63 = por %p61, %p62
    %p65 = scmp.ne.s32.totalorder %s48, %s64
    %p66 = scmp.eq.s32.totalorder %s14, 0
    %p67 = por %p65, %p66
    %s68 = ssub.s32 %s8, %s15
    %p69 = scmp.eq.s32.totalorder %s68, 0
    %s71 = sadd.s32 %s70, 1
    %s72 = scalar_select %p69, %s70, %s71
    %p75 = pneg %p69
    %p76 = scmp.eq.s32.totalorder %s8, 3
    %p77 = por %p75, %p76
    %p78 = scmp.ne.s32.totalorder %s70, %s73
    %p79 = scmp.eq.s32.totalorder %s8, 0
    %p80 = por %p78, %p79
    %p81 = scmp.ne.s32.totalorder %s70, %s73
    %p82 = scmp.eq.s32.totalorder %s13, 3
    %p83 = por %p81, %p82
    %p84 = scmp.ne.s32.totalorder %s73, %s74
    %p85 = scmp.eq.s32.totalorder %s13, 0
    %p86 = por %p84, %p85
    %p87 = scmp.ne.s32.totalorder %s73, %s74
    %p88 = scmp.eq.s32.totalorder %s14, 3
    %p89 = por %p87, %p88
    %p91 = scmp.ne.s32.totalorder %s74, %s90
    %p92 = scmp.eq.s32.totalorder %s14, 0
    %p93 = por %p91, %p92
    %p94 = scmp.le.s32.totalorder 1, %s8
    %p95 = scmp.lt.s32.totalorder %s8, 5
    %p96 = pnand %p94, %p95
    %p97 = pneg %p96
    // Predicated region
    $region9: #{gang_forward.7} parent=5 // pred_check
      _
    $region10: #{gang_forward.7} parent=5 // pred_check_branch
      %99 = sbr.rel (%p96) target = $region12
    $region11: #{gang_forward.7} parent=5 // pred_region
      %s100 = ssub.s32 %s8, 1
    $region12: #{gang_forward.7} parent=5 // pred_fallthru
      _
    %p101 = scmp.lt.s32.totalorder %s8, 4
    // Predicated region
    $region13: #{gang_forward.7} parent=5 // pred_check
      %p102 = pneg %p101
    $region14: #{gang_forward.7} parent=5 // pred_check_branch
      %104 = sbr.rel (%p102) target = $region16
    $region15: #{gang_forward.7} parent=5 // pred_region
      // Predicated region
      $region17: #{gang_forward.7} parent=15 // pred_check
        %p105 = pneg %p28
      $region18: #{gang_forward.7} parent=15 // pred_check_branch
        %107 = sbr.rel (%p105) target = $region20
      $region19: #{gang_forward.7} parent=15 // pred_region
        %p108 = scmp.lt.s32.totalorder %s8, 3
        %s109 = scalar_select %p108, %s8, 3
        %s110 = smul.addr %s109, 32
        %s111 = smul.addr %s110, 4
        %s112 = scalar_lea.vmem %s0, %s111
      $region20: #{gang_forward.7} parent=15 // pred_fallthru
        _
      // Predicated region
      $region21: #{gang_forward.7} parent=15 // pred_check
        %p113 = pneg %p54
      $region22: #{gang_forward.7} parent=15 // pred_check_branch
        %115 = sbr.rel (%p113) target = $region24
      $region23: #{gang_forward.7} parent=15 // pred_region
        %p116 = scmp.lt.s32.totalorder %s8, 3
        %s117 = scalar_select %p116, %s8, 3
        %s118 = smul.addr %s117, 2
        %s119 = scalar_lea.vmem %s1, %s118
      $region24: #{gang_forward.7} parent=15 // pred_fallthru
        _
    $region16: #{gang_forward.7} parent=5 // pred_fallthru
      _
    %p120 = scmp.le.s32.totalorder 1, %s8
    %p121 = scmp.lt.s32.totalorder %s8, 5
    %p122 = pnand %p120, %p121
    %p123 = pneg %p122
    // Predicated region
    $region25: #{gang_forward.7} parent=5 // pred_check
      _
    $region26: #{gang_forward.7} parent=5 // pred_check_branch
      %125 = sbr.rel (%p122) target = $region28
    $region27: #{gang_forward.7} parent=5 // pred_region
      %s126 = ssub.s32 %s8, 1
      %p127 = scmp.lt.s32.totalorder %s13, 3
      %s128 = scalar_select %p127, %s13, 3
      %s129 = smul.addr %s128, 32
      %s130 = smul.addr %s129, 4
      %s131 = scalar_lea.vmem %s0, %s130
      %p132 = pneg %p34
      %p133 = pneg %p31
      %p134 = scmp.lt.s32.totalorder %s13, 3
      %s135 = scalar_select %p134, %s13, 3
      %s136 = smul.addr %s135, 2
      %s137 = scalar_lea.vmem %s1, %s136
      %p138 = pneg %p60
      %p139 = pneg %p57
      %p140 = pneg %p86
      %p141 = pneg %p83
      %p142 = scmp.lt.s32.totalorder %s13, 3
      %s143 = scalar_select %p142, %s13, 3
      %s144 = smul.addr %s143, 4
      %s145 = smul.addr %s144, 4
      %s146 = scalar_lea.vmem %s2, %s145
      %p147 = scmp.lt.s32.totalorder %s13, 3
      %s148 = scalar_select %p147, %s13, 3
      %s149 = smul.addr %s148, 32
      %s150 = smul.addr %s149, 4
      %s151 = scalar_lea.vmem %s0, %s150
      %p152 = scmp.lt.s32.totalorder %s13, 3
      %s153 = scalar_select %p152, %s13, 3
      %s154 = smul.addr %s153, 2
      %s155 = scalar_lea.vmem %s1, %s154
      %p156 = scmp.lt.s32.totalorder %s13, 3
      %s157 = scalar_select %p156, %s13, 3
      %s158 = smul.addr %s157, 4
      %s159 = smul.addr %s158, 4
      %s160 = scalar_lea.vmem %s2, %s159
      %v162 = vld [vmem:[%s155] sm:$0x3]
      %v163 = vld [vmem:[%s151] sm:$0xff]
      %v164 = vld [vmem:[%s151 + $0x8] sm:$0xff]
      %v165 = vld [vmem:[%s151 + $0x10] sm:$0xff]
      %v166 = vld [vmem:[%s151 + $0x18] sm:$0xff]
      %v167 = vld [vmem:[%s151 + $0x20] sm:$0xff]
      %v168 = vld [vmem:[%s151 + $0x28] sm:$0xff]
      %v169 = vld [vmem:[%s151 + $0x30] sm:$0xff]
      %v170 = vld [vmem:[%s151 + $0x38] sm:$0xff]
      %v171 = vld [vmem:[%s151 + $0x40] sm:$0xff]
      %v172 = vld [vmem:[%s151 + $0x48] sm:$0xff]
      %v173 = vld [vmem:[%s151 + $0x50] sm:$0xff]
      %v174 = vld [vmem:[%s151 + $0x58] sm:$0xff]
      %v175 = vld [vmem:[%s151 + $0x60] sm:$0xff]
      %v176 = vld [vmem:[%s151 + $0x68] sm:$0xff]
      %v177 = vld [vmem:[%s151 + $0x70] sm:$0xff]
      %v178 = vld [vmem:[%s151 + $0x78] sm:$0xff]
      %v195 = vunpack.c.l.b16 %v163
      %v196 = vunpack.c.h.b16 %v163
      %v197 = vunpack.c.l.b16 %v164
      %v198 = vunpack.c.h.b16 %v164
      %v199 = vunpack.c.l.b16 %v165
      %v200 = vunpack.c.h.b16 %v165
      %v201 = vunpack.c.l.b16 %v166
      %v202 = vunpack.c.h.b16 %v166
      %v203 = vunpack.c.l.b16 %v167
      %v204 = vunpack.c.h.b16 %v167
      %v205 = vunpack.c.l.b16 %v168
      %v206 = vunpack.c.h.b16 %v168
      %v207 = vunpack.c.l.b16 %v169
      %v208 = vunpack.c.h.b16 %v169
      %v209 = vunpack.c.l.b16 %v170
      %v210 = vunpack.c.h.b16 %v170
      %v211 = vunpack.c.l.b16 %v171
      %v212 = vunpack.c.h.b16 %v171
      %v213 = vunpack.c.l.b16 %v172
      %v214 = vunpack.c.h.b16 %v172
      %v215 = vunpack.c.l.b16 %v173
      %v216 = vunpack.c.h.b16 %v173
      %v217 = vunpack.c.l.b16 %v174
      %v218 = vunpack.c.h.b16 %v174
      %v219 = vunpack.c.l.b16 %v175
      %v220 = vunpack.c.h.b16 %v175
      %v221 = vunpack.c.l.b16 %v176
      %v222 = vunpack.c.h.b16 %v176
      %v223 = vunpack.c.l.b16 %v177
      %v224 = vunpack.c.h.b16 %v177
      %v225 = vunpack.c.l.b16 %v178
      %v226 = vunpack.c.h.b16 %v178
      %v227 = vpack.c.b16 %v199, %v195
      %v228 = vpack.c.b16 %v200, %v196
      %v229 = vpack.c.b16 %v201, %v197
      %v230 = vpack.c.b16 %v202, %v198
      %v231 = vpack.c.b16 %v207, %v203
      %v232 = vpack.c.b16 %v208, %v204
      %v233 = vpack.c.b16 %v209, %v205
      %v234 = vpack.c.b16 %v210, %v206
      %v235 = vpack.c.b16 %v215, %v211
      %v236 = vpack.c.b16 %v216, %v212
      %v237 = vpack.c.b16 %v217, %v213
      %v238 = vpack.c.b16 %v218, %v214
      %v239 = vpack.c.b16 %v223, %v219
      %v240 = vpack.c.b16 %v224, %v220
      %v241 = vpack.c.b16 %v225, %v221
      %v242 = vpack.c.b16 %v226, %v222
      %vm259 = vcmask 523264
      %v261 = vsel %vm259, %v162, 0
      %263 = vmatprep.subr.bf16.mxu0 %v228
      %264 = vmatpush1.bf16.msra.mxu0 %v227
      %265 = vmatprep.subr.bf16.mxu0 %v232
      %266 = vmatpush1.bf16.msra.mxu0 %v231
      %267 = vmatprep.subr.bf16.mxu0 %v236
      %268 = vmatpush1.bf16.msra.mxu0 %v235
      %269 = vmatprep.subr.bf16.mxu0 %v240
      %270 = vmatpush1.bf16.msra.mxu0 %v239
      %271 = vmatprep.subr.bf16.mxu0 0
      %272 = vmatpush1.bf16.msra.mxu0 0
      %273 = vmatprep.subr.bf16.mxu0 0
      %274 = vmatpush1.bf16.msra.mxu0 0
      %275 = vmatprep.subr.bf16.mxu0 0
      %276 = vmatpush1.bf16.msra.mxu0 0
      %277 = vmatprep.subr.bf16.mxu0 0
      %278 = vmatpush1.bf16.msra.mxu0 0
      %279 = vmatprep.subr.bf16.mxu0 0
      %280 = vmatpush1.bf16.msra.mxu0 0
      %281 = vmatprep.subr.bf16.mxu0 0
      %282 = vmatpush1.bf16.msra.mxu0 0
      %283 = vmatprep.subr.bf16.mxu0 0
      %284 = vmatpush1.bf16.msra.mxu0 0
      %285 = vmatprep.subr.bf16.mxu0 0
      %286 = vmatpush1.bf16.msra.mxu0 0
      %287 = vmatprep.subr.bf16.mxu0 0
      %288 = vmatpush1.bf16.msra.mxu0 0
      %289 = vmatprep.subr.bf16.mxu0 0
      %290 = vmatpush1.bf16.msra.mxu0 0
      %291 = vmatprep.subr.bf16.mxu0 0
      %292 = vmatpush1.bf16.msra.mxu0 0
      %293 = vmatprep.subr.bf16.mxu0 0
      %294 = vmatpush1.bf16.msra.mxu0 0
      %295 = vmatprep.mubr.bf16.mxu0 0
      %296 = vmatmul.mubr.bf16.gmra.mrb[0].mxu0 %v261
      %v297 = vpop.f32.mrb[0].mxu0
      %v298 = vadd.f32 0.0, %v297
      %v299 = vpop.f32.mrb[0].mxu0
      %v300 = vadd.f32 0.0, %v299
      %v301 = vpop.f32.mrb[0].mxu0
      %v302 = vpop.f32.mrb[0].mxu0
      %303 = vdwg.mxu0
      %304 = vmatprep.subr.bf16.mxu0 %v230
      %305 = vmatpush1.bf16.msra.mxu0 %v229
      %306 = vmatprep.subr.bf16.mxu0 %v234
      %307 = vmatpush1.bf16.msra.mxu0 %v233
      %308 = vmatprep.subr.bf16.mxu0 %v238
      %309 = vmatpush1.bf16.msra.mxu0 %v237
      %310 = vmatprep.subr.bf16.mxu0 %v242
      %311 = vmatpush1.bf16.msra.mxu0 %v241
      %312 = vmatprep.subr.bf16.mxu0 0
      %313 = vmatpush1.bf16.msra.mxu0 0
      %314 = vmatprep.subr.bf16.mxu0 0
      %315 = vmatpush1.bf16.msra.mxu0 0
      %316 = vmatprep.subr.bf16.mxu0 0
      %317 = vmatpush1.bf16.msra.mxu0 0
      %318 = vmatprep.subr.bf16.mxu0 0
      %319 = vmatpush1.bf16.msra.mxu0 0
      %320 = vmatprep.subr.bf16.mxu0 0
      %321 = vmatpush1.bf16.msra.mxu0 0
      %322 = vmatprep.subr.bf16.mxu0 0
      %323 = vmatpush1.bf16.msra.mxu0 0
      %324 = vmatprep.subr.bf16.mxu0 0
      %325 = vmatpush1.bf16.msra.mxu0 0
      %326 = vmatprep.subr.bf16.mxu0 0
      %327 = vmatpush1.bf16.msra.mxu0 0
      %328 = vmatprep.subr.bf16.mxu0 0
      %329 = vmatpush1.bf16.msra.mxu0 0
      %330 = vmatprep.subr.bf16.mxu0 0
      %331 = vmatpush1.bf16.msra.mxu0 0
      %332 = vmatprep.subr.bf16.mxu0 0
      %333 = vmatpush1.bf16.msra.mxu0 0
      %334 = vmatprep.subr.bf16.mxu0 0
      %335 = vmatpush1.bf16.msra.mxu0 0
      %336 = vmatprep.mubr.bf16.mxu0 0
      %337 = vmatmul.mubr.bf16.gmra.mrb[0].mxu0 %v261
      %v338 = vpop.f32.mrb[0].mxu0
      %v339 = vadd.f32 0.0, %v338
      %v340 = vpop.f32.mrb[0].mxu0
      %v341 = vadd.f32 0.0, %v340
      %v342 = vpop.f32.mrb[0].mxu0
      %v343 = vpop.f32.mrb[0].mxu0
      %344 = vdwg.mxu0
      %v345 = vtanh.pop %v298
      %v346 = vtanh.pop %v300
      %v347 = vtanh.pop %v339
      %v348 = vtanh.pop %v341
      %v353 = vcombine.low %v345, %v346
      %v354 = vcombine.low %v347, %v348
      %357 = vst [vmem:[%s160] sm:$0x77] %v353
      %358 = vst [vmem:[%s160 + $0x8] sm:$0x77] %v354
      %p359 = scmp.lt.s32.totalorder %s13, 3
      %s360 = scalar_select %p359, %s13, 3
      %s361 = smul.addr %s360, 4
      %s362 = smul.addr %s361, 4
      %s363 = scalar_lea.vmem %s2, %s362
      // Predicated region
      $region29: #{gang_forward.7} parent=27 // pred_check
        %p364 = pneg %p83
      $region30: #{gang_forward.7} parent=27 // pred_check_branch
        %366 = sbr.rel (%p364) target = $region32
      $region31: #{gang_forward.7} parent=27 // pred_region
        _
      $region32: #{gang_forward.7} parent=27 // pred_fallthru
        _
    $region28: #{gang_forward.7} parent=5 // pred_fallthru
      _
    %p367 = scmp.le.s32.totalorder 2, %s8
    // Predicated region
    $region33: #{gang_forward.7} parent=5 // pred_check
      %p368 = pneg %p367
    $region34: #{gang_forward.7} parent=5 // pred_check_branch
      %370 = sbr.rel (%p368) target = $region36
    $region35: #{gang_forward.7} parent=5 // pred_region
      %s371 = ssub.s32 %s8, 2
      // Predicated region
      $region37: #{gang_forward.7} parent=35 // pred_check
        %p372 = pneg %p89
      $region38: #{gang_forward.7} parent=35 // pred_check_branch
        %374 = sbr.rel (%p372) target = $region40
      $region39: #{gang_forward.7} parent=35 // pred_region
        %p375 = scmp.lt.s32.totalorder %s14, 3
        %s376 = scalar_select %p375, %s14, 3
        %s377 = smul.addr %s376, 4
        %s378 = smul.addr %s377, 4
        %s379 = scalar_lea.vmem %s2, %s378
      $region40: #{gang_forward.7} parent=35 // pred_fallthru
        _
    $region36: #{gang_forward.7} parent=5 // pred_fallthru
      _
  $region6: #{gang_forward.7} parent=0 // loop_footer
    %s12 = sadd.s32 1, %s8
  $region7: #{gang_forward.7} parent=0 // loop_footer_branch
    %7 = sbr.rel target = $region3
  $region8: #{gang_forward.7} parent=0 // loop_exit
    _

</llo_original>
